<compile_context>
chip_gen: v7x
topology: tpu7x:2x2x1
jax: 0.10.0
libtpu: 0.0.40
codegen_flags: <defaults>
</compile_context>

<pallas_src>
import functools

import jax
import jax.numpy as jnp
from jax.experimental import pallas as pl
from jax.experimental.pallas import tpu as pltpu


def _attention_kernel(x_ref, w_ref, out_ref, attn_ref, *, num_heads, head_dim, scale):
    # x_ref:    (1, N, C)       one batch element
    # w_ref:    (C, 3C)         fused qkv weight, pre-transposed (x @ w == qkv(x))
    # out_ref:  (1, N, C)       attention output for this batch element
    # attn_ref: (1, H, N, N)    per-head attention maps for this batch element
    C = num_heads * head_dim

    # One fused projection per batch element: (N, C) @ (C, 3C) -> (N, 3C).
    x = x_ref[0]
    qkv = jnp.dot(x, w_ref[...], preferred_element_type=jnp.float32)

    outs = []
    for h in range(num_heads):
        lo = h * head_dim
        # Static lane slices into the fused projection; fold the softmax scale into q
        # here (once per row, not per (N, N) score tile).
        q = qkv[:, lo:lo + head_dim] * scale                 # (N, d)
        k = qkv[:, C + lo:C + lo + head_dim]                 # (N, d)
        v = qkv[:, 2 * C + lo:2 * C + lo + head_dim]         # (N, d)

        # q @ k^T without materialising k^T: contract the last axis of both operands.
        s = jax.lax.dot_general(q, k, (((1,), (1,)), ((), ())),
                                preferred_element_type=jnp.float32)      # (N, N)
        # numerically-stable softmax along the last axis
        s = s - jnp.max(s, axis=-1, keepdims=True)
        e = jnp.exp(s)
        p = e * pl.reciprocal(jnp.sum(e, axis=-1, keepdims=True), approx=True)

        attn_ref[0, h] = p.astype(attn_ref.dtype)
        outs.append(jnp.dot(p, v, preferred_element_type=jnp.float32))   # (N, d)

    # Assemble the full (N, C) row and store it once (lane-dense) instead of
    # H masked sub-128-lane partial stores.
    out_ref[0] = jnp.concatenate(outs, axis=-1).astype(out_ref.dtype)


def attention_layer(x, w_qkv, num_heads=8, qk_scale=None):
    """Pallas implementation of AttentionLayer.forward (attn_drop = proj_drop = 0)."""
    B, N, C = x.shape
    assert C % num_heads == 0
    head_dim = C // num_heads
    scale = qk_scale if qk_scale is not None else head_dim ** (-0.5)

    # Fused qkv weight, pre-transposed once on the host: (3C, C) -> (C, 3C) so the
    # kernel issues a single x @ W matmul per batch element.
    w_t = w_qkv.T

    kernel = functools.partial(
        _attention_kernel, num_heads=num_heads, head_dim=head_dim, scale=scale)

    out, attn = pl.pallas_call(
        kernel,
        out_shape=(
            jax.ShapeDtypeStruct((B, N, C), x.dtype),
            jax.ShapeDtypeStruct((B, num_heads, N, N), x.dtype),
        ),
        grid_spec=pltpu.PrefetchScalarGridSpec(
            num_scalar_prefetch=0,
            grid=(B,),
            in_specs=[
                pl.BlockSpec((1, N, C), lambda b: (b, 0, 0)),              # x (per b)
                pl.BlockSpec((C, 3 * C), lambda b: (0, 0)),                # fused weight
            ],
            out_specs=[
                pl.BlockSpec((1, N, C), lambda b: (b, 0, 0)),              # out (per b)
                pl.BlockSpec((1, num_heads, N, N), lambda b: (b, 0, 0, 0)),  # attn (per b)
            ],
        ),
        compiler_params=pltpu.CompilerParams(
            dimension_semantics=("parallel",),
            vmem_limit_bytes=48 * 1024 * 1024,  # above 16/32 MiB defaults, below v7x 64 MiB
        ),
    )(x, w_t)
    return out, attn


def _reference(x, w_qkv, num_heads=8, qk_scale=None):
    """Pure-JAX reference mirroring the PyTorch forward."""
    B, N, C = x.shape
    head_dim = C // num_heads
    scale = qk_scale if qk_scale is not None else head_dim ** (-0.5)
    qkv = x @ w_qkv.T                                  # (B, N, 3C)
    qkv = qkv.reshape(B, N, 3, num_heads, head_dim)
    qkv = jnp.transpose(qkv, (2, 0, 3, 1, 4))          # (3, B, H, N, d)
    q, k, v = qkv[0], qkv[1], qkv[2]
    attn = jnp.einsum('bhnd,bhmd->bhnm', q, k) * scale
    attn = jax.nn.softmax(attn, axis=-1)
    out = jnp.einsum('bhnm,bhmd->bhnd', attn, v)
    out = jnp.transpose(out, (0, 2, 1, 3)).reshape(B, N, C)
    return out, attn


if __name__ == "__main__":
    B, N, C = 2, 8, 32
    num_heads = 8

    key = jax.random.PRNGKey(0)
    kx, kw = jax.random.split(key)
    x = jax.random.normal(kx, (B, N, C), dtype=jnp.float32)
    # Deterministic synthetic qkv weight, PyTorch layout (out_features=3C, in_features=C).
    w_qkv = jax.random.normal(kw, (3 * C, C), dtype=jnp.float32) * (C ** -0.5)

    out, attn = attention_layer(x, w_qkv, num_heads=num_heads)
    out = jax.block_until_ready(out)
    attn = jax.block_until_ready(attn)

    ref_out, ref_attn = _reference(x, w_qkv, num_heads=num_heads)
    assert out.shape == (B, N, C) and attn.shape == (B, num_heads, N, N)
    # Tolerance accounts for the approximate-reciprocal softmax normalisation.
    assert jnp.allclose(out, ref_out, atol=5e-3, rtol=5e-3)
    assert jnp.allclose(attn, ref_attn, atol=5e-3, rtol=5e-3)

    print("KERNEL_OK")
</pallas_src>

<mosaic_0001>
module attributes {stable_mosaic.version = 11 : i64} {
  func.func @_attention_kernel(%arg0: i32, %arg1: memref<1x8x32xf32, #tpu.memory_space<vmem>>, %arg2: memref<32x96xf32, #tpu.memory_space<vmem>>, %arg3: memref<1x8x32xf32, #tpu.memory_space<vmem>>, %arg4: memref<1x8x8x8xf32, #tpu.memory_space<vmem>>) attributes {dimension_semantics = [#tpu.dimension_semantics<parallel>], iteration_bounds = array<i64: 2>, scalar_prefetch = 0 : i64, scratch_operands = 0 : i64, tpu.core_type = #tpu.core_type<tc>, window_params = [{transform_indices = @transform_0, window_bounds = array<i64: 1, 8, 32>}, {pipeline_mode = #tpu.pipeline_mode<synchronous>, transform_indices = @transform_1, window_bounds = array<i64: 32, 96>}, {transform_indices = @transform_2, window_bounds = array<i64: 1, 8, 32>}, {transform_indices = @transform_3, window_bounds = array<i64: 1, 8, 8, 8>}]} {
    %c0 = arith.constant 0 : index
    %c0_0 = arith.constant 0 : index
    %c0_1 = arith.constant 0 : index
    %0 = vector.load %arg1[%c0, %c0_0, %c0_1] : memref<1x8x32xf32, #tpu.memory_space<vmem>>, vector<1x8x32xf32>
    %1 = vector.shape_cast %0 : vector<1x8x32xf32> to vector<8x32xf32>
    %c0_2 = arith.constant 0 : index
    %c0_3 = arith.constant 0 : index
    %2 = vector.load %arg2[%c0_2, %c0_3] : memref<32x96xf32, #tpu.memory_space<vmem>>, vector<32x96xf32>
    %cst = arith.constant dense<0.000000e+00> : vector<8x96xf32>
    %3 = tpu.matmul %1, %2, %cst {dimension_numbers = #tpu.dot_dimension_numbers<[1], [0], [0], [1], [0, 0, 1, 1], [], []>} : vector<8x32xf32>, vector<32x96xf32>, vector<8x96xf32> -> vector<8x96xf32>
    %4 = vector.extract_strided_slice %3 {offsets = [0, 0], sizes = [8, 4], strides = [1, 1]} : vector<8x96xf32> to vector<8x4xf32>
    %cst_4 = arith.constant 5.000000e-01 : f32
    %5 = vector.broadcast %cst_4 : f32 to vector<8x4xf32>
    %6 = arith.mulf %4, %5 : vector<8x4xf32>
    %7 = vector.extract_strided_slice %3 {offsets = [0, 32], sizes = [8, 4], strides = [1, 1]} : vector<8x96xf32> to vector<8x4xf32>
    %8 = vector.extract_strided_slice %3 {offsets = [0, 64], sizes = [8, 4], strides = [1, 1]} : vector<8x96xf32> to vector<8x4xf32>
    %cst_5 = arith.constant dense<0.000000e+00> : vector<8x8xf32>
    %9 = tpu.matmul %6, %7, %cst_5 {dimension_numbers = #tpu.dot_dimension_numbers<[1], [1], [0], [0], [0, 0, 1, 0], [], []>} : vector<8x4xf32>, vector<8x4xf32>, vector<8x8xf32> -> vector<8x8xf32>
    %cst_6 = arith.constant dense<0xFF800000> : vector<8xf32>
    %10 = vector.multi_reduction <maximumf>, %9, %cst_6 [1] : vector<8x8xf32> to vector<8xf32>
    %11 = vector.shape_cast %10 : vector<8xf32> to vector<8x1xf32>
    %12 = vector.broadcast %11 : vector<8x1xf32> to vector<8x8xf32>
    %13 = arith.subf %9, %12 : vector<8x8xf32>
    %14 = math.exp %13 : vector<8x8xf32>
    %cst_7 = arith.constant dense<0.000000e+00> : vector<8xf32>
    %15 = vector.multi_reduction <add>, %14, %cst_7 [1] : vector<8x8xf32> to vector<8xf32>
    %16 = vector.shape_cast %15 : vector<8xf32> to vector<8x1xf32>
    %17 = tpu.reciprocal %16 {approx = true} : vector<8x1xf32> -> vector<8x1xf32>
    %18 = vector.broadcast %17 : vector<8x1xf32> to vector<8x8xf32>
    %19 = arith.mulf %14, %18 : vector<8x8xf32>
    %c0_8 = arith.constant 0 : index
    %c0_9 = arith.constant 0 : index
    %c0_10 = arith.constant 0 : index
    %c0_11 = arith.constant 0 : index
    %20 = vector.load %arg4[%c0_8, %c0_9, %c0_10, %c0_11] : memref<1x8x8x8xf32, #tpu.memory_space<vmem>>, vector<1x1x8x8xf32>
    %21 = vector.shape_cast %20 : vector<1x1x8x8xf32> to vector<8x8xf32>
    %22 = vector.shape_cast %19 : vector<8x8xf32> to vector<1x1x8x8xf32>
    tpu.vector_store %arg4[%c0_8, %c0_9, %c0_10, %c0_11], %22 {strides = array<i32>} : memref<1x8x8x8xf32, #tpu.memory_space<vmem>>, vector<1x1x8x8xf32>,
    %cst_12 = arith.constant dense<0.000000e+00> : vector<8x4xf32>
    %23 = tpu.matmul %19, %8, %cst_12 {dimension_numbers = #tpu.dot_dimension_numbers<[1], [0], [0], [1], [0, 0, 1, 1], [], []>} : vector<8x8xf32>, vector<8x4xf32>, vector<8x4xf32> -> vector<8x4xf32>
    %24 = vector.extract_strided_slice %3 {offsets = [0, 4], sizes = [8, 4], strides = [1, 1]} : vector<8x96xf32> to vector<8x4xf32>
    %cst_13 = arith.constant 5.000000e-01 : f32
    %25 = vector.broadcast %cst_13 : f32 to vector<8x4xf32>
    %26 = arith.mulf %24, %25 : vector<8x4xf32>
    %27 = vector.extract_strided_slice %3 {offsets = [0, 36], sizes = [8, 4], strides = [1, 1]} : vector<8x96xf32> to vector<8x4xf32>
    %28 = vector.extract_strided_slice %3 {offsets = [0, 68], sizes = [8, 4], strides = [1, 1]} : vector<8x96xf32> to vector<8x4xf32>
    %cst_14 = arith.constant dense<0.000000e+00> : vector<8x8xf32>
    %29 = tpu.matmul %26, %27, %cst_14 {dimension_numbers = #tpu.dot_dimension_numbers<[1], [1], [0], [0], [0, 0, 1, 0], [], []>} : vector<8x4xf32>, vector<8x4xf32>, vector<8x8xf32> -> vector<8x8xf32>
    %cst_15 = arith.constant dense<0xFF800000> : vector<8xf32>
    %30 = vector.multi_reduction <maximumf>, %29, %cst_15 [1] : vector<8x8xf32> to vector<8xf32>
    %31 = vector.shape_cast %30 : vector<8xf32> to vector<8x1xf32>
    %32 = vector.broadcast %31 : vector<8x1xf32> to vector<8x8xf32>
    %33 = arith.subf %29, %32 : vector<8x8xf32>
    %34 = math.exp %33 : vector<8x8xf32>
    %cst_16 = arith.constant dense<0.000000e+00> : vector<8xf32>
    %35 = vector.multi_reduction <add>, %34, %cst_16 [1] : vector<8x8xf32> to vector<8xf32>
    %36 = vector.shape_cast %35 : vector<8xf32> to vector<8x1xf32>
    %37 = tpu.reciprocal %36 {approx = true} : vector<8x1xf32> -> vector<8x1xf32>
    %38 = vector.broadcast %37 : vector<8x1xf32> to vector<8x8xf32>
    %39 = arith.mulf %34, %38 : vector<8x8xf32>
    %c0_17 = arith.constant 0 : index
    %c1 = arith.constant 1 : index
    %c0_18 = arith.constant 0 : index
    %c0_19 = arith.constant 0 : index
    %40 = vector.load %arg4[%c0_17, %c1, %c0_18, %c0_19] : memref<1x8x8x8xf32, #tpu.memory_space<vmem>>, vector<1x1x8x8xf32>
    %41 = vector.shape_cast %40 : vector<1x1x8x8xf32> to vector<8x8xf32>
    %42 = vector.shape_cast %39 : vector<8x8xf32> to vector<1x1x8x8xf32>
    tpu.vector_store %arg4[%c0_17, %c1, %c0_18, %c0_19], %42 {strides = array<i32>} : memref<1x8x8x8xf32, #tpu.memory_space<vmem>>, vector<1x1x8x8xf32>,
    %cst_20 = arith.constant dense<0.000000e+00> : vector<8x4xf32>
    %43 = tpu.matmul %39, %28, %cst_20 {dimension_numbers = #tpu.dot_dimension_numbers<[1], [0], [0], [1], [0, 0, 1, 1], [], []>} : vector<8x8xf32>, vector<8x4xf32>, vector<8x4xf32> -> vector<8x4xf32>
    %44 = vector.extract_strided_slice %3 {offsets = [0, 8], sizes = [8, 4], strides = [1, 1]} : vector<8x96xf32> to vector<8x4xf32>
    %cst_21 = arith.constant 5.000000e-01 : f32
    %45 = vector.broadcast %cst_21 : f32 to vector<8x4xf32>
    %46 = arith.mulf %44, %45 : vector<8x4xf32>
    %47 = vector.extract_strided_slice %3 {offsets = [0, 40], sizes = [8, 4], strides = [1, 1]} : vector<8x96xf32> to vector<8x4xf32>
    %48 = vector.extract_strided_slice %3 {offsets = [0, 72], sizes = [8, 4], strides = [1, 1]} : vector<8x96xf32> to vector<8x4xf32>
    %cst_22 = arith.constant dense<0.000000e+00> : vector<8x8xf32>
    %49 = tpu.matmul %46, %47, %cst_22 {dimension_numbers = #tpu.dot_dimension_numbers<[1], [1], [0], [0], [0, 0, 1, 0], [], []>} : vector<8x4xf32>, vector<8x4xf32>, vector<8x8xf32> -> vector<8x8xf32>
    %cst_23 = arith.constant dense<0xFF800000> : vector<8xf32>
    %50 = vector.multi_reduction <maximumf>, %49, %cst_23 [1] : vector<8x8xf32> to vector<8xf32>
    %51 = vector.shape_cast %50 : vector<8xf32> to vector<8x1xf32>
    %52 = vector.broadcast %51 : vector<8x1xf32> to vector<8x8xf32>
    %53 = arith.subf %49, %52 : vector<8x8xf32>
    %54 = math.exp %53 : vector<8x8xf32>
    %cst_24 = arith.constant dense<0.000000e+00> : vector<8xf32>
    %55 = vector.multi_reduction <add>, %54, %cst_24 [1] : vector<8x8xf32> to vector<8xf32>
    %56 = vector.shape_cast %55 : vector<8xf32> to vector<8x1xf32>
    %57 = tpu.reciprocal %56 {approx = true} : vector<8x1xf32> -> vector<8x1xf32>
    %58 = vector.broadcast %57 : vector<8x1xf32> to vector<8x8xf32>
    %59 = arith.mulf %54, %58 : vector<8x8xf32>
    %c0_25 = arith.constant 0 : index
    %c2 = arith.constant 2 : index
    %c0_26 = arith.constant 0 : index
    %c0_27 = arith.constant 0 : index
    %60 = vector.load %arg4[%c0_25, %c2, %c0_26, %c0_27] : memref<1x8x8x8xf32, #tpu.memory_space<vmem>>, vector<1x1x8x8xf32>
    %61 = vector.shape_cast %60 : vector<1x1x8x8xf32> to vector<8x8xf32>
    %62 = vector.shape_cast %59 : vector<8x8xf32> to vector<1x1x8x8xf32>
    tpu.vector_store %arg4[%c0_25, %c2, %c0_26, %c0_27], %62 {strides = array<i32>} : memref<1x8x8x8xf32, #tpu.memory_space<vmem>>, vector<1x1x8x8xf32>,
    %cst_28 = arith.constant dense<0.000000e+00> : vector<8x4xf32>
    %63 = tpu.matmul %59, %48, %cst_28 {dimension_numbers = #tpu.dot_dimension_numbers<[1], [0], [0], [1], [0, 0, 1, 1], [], []>} : vector<8x8xf32>, vector<8x4xf32>, vector<8x4xf32> -> vector<8x4xf32>
    %64 = vector.extract_strided_slice %3 {offsets = [0, 12], sizes = [8, 4], strides = [1, 1]} : vector<8x96xf32> to vector<8x4xf32>
    %cst_29 = arith.constant 5.000000e-01 : f32
    %65 = vector.broadcast %cst_29 : f32 to vector<8x4xf32>
    %66 = arith.mulf %64, %65 : vector<8x4xf32>
    %67 = vector.extract_strided_slice %3 {offsets = [0, 44], sizes = [8, 4], strides = [1, 1]} : vector<8x96xf32> to vector<8x4xf32>
    %68 = vector.extract_strided_slice %3 {offsets = [0, 76], sizes = [8, 4], strides = [1, 1]} : vector<8x96xf32> to vector<8x4xf32>
    %cst_30 = arith.constant dense<0.000000e+00> : vector<8x8xf32>
    %69 = tpu.matmul %66, %67, %cst_30 {dimension_numbers = #tpu.dot_dimension_numbers<[1], [1], [0], [0], [0, 0, 1, 0], [], []>} : vector<8x4xf32>, vector<8x4xf32>, vector<8x8xf32> -> vector<8x8xf32>
    %cst_31 = arith.constant dense<0xFF800000> : vector<8xf32>
    %70 = vector.multi_reduction <maximumf>, %69, %cst_31 [1] : vector<8x8xf32> to vector<8xf32>
    %71 = vector.shape_cast %70 : vector<8xf32> to vector<8x1xf32>
    %72 = vector.broadcast %71 : vector<8x1xf32> to vector<8x8xf32>
    %73 = arith.subf %69, %72 : vector<8x8xf32>
    %74 = math.exp %73 : vector<8x8xf32>
    %cst_32 = arith.constant dense<0.000000e+00> : vector<8xf32>
    %75 = vector.multi_reduction <add>, %74, %cst_32 [1] : vector<8x8xf32> to vector<8xf32>
    %76 = vector.shape_cast %75 : vector<8xf32> to vector<8x1xf32>
    %77 = tpu.reciprocal %76 {approx = true} : vector<8x1xf32> -> vector<8x1xf32>
    %78 = vector.broadcast %77 : vector<8x1xf32> to vector<8x8xf32>
    %79 = arith.mulf %74, %78 : vector<8x8xf32>
    %c0_33 = arith.constant 0 : index
    %c3 = arith.constant 3 : index
    %c0_34 = arith.constant 0 : index
    %c0_35 = arith.constant 0 : index
    %80 = vector.load %arg4[%c0_33, %c3, %c0_34, %c0_35] : memref<1x8x8x8xf32, #tpu.memory_space<vmem>>, vector<1x1x8x8xf32>
    %81 = vector.shape_cast %80 : vector<1x1x8x8xf32> to vector<8x8xf32>
    %82 = vector.shape_cast %79 : vector<8x8xf32> to vector<1x1x8x8xf32>
    tpu.vector_store %arg4[%c0_33, %c3, %c0_34, %c0_35], %82 {strides = array<i32>} : memref<1x8x8x8xf32, #tpu.memory_space<vmem>>, vector<1x1x8x8xf32>,
    %cst_36 = arith.constant dense<0.000000e+00> : vector<8x4xf32>
    %83 = tpu.matmul %79, %68, %cst_36 {dimension_numbers = #tpu.dot_dimension_numbers<[1], [0], [0], [1], [0, 0, 1, 1], [], []>} : vector<8x8xf32>, vector<8x4xf32>, vector<8x4xf32> -> vector<8x4xf32>
    %84 = vector.extract_strided_slice %3 {offsets = [0, 16], sizes = [8, 4], strides = [1, 1]} : vector<8x96xf32> to vector<8x4xf32>
    %cst_37 = arith.constant 5.000000e-01 : f32
    %85 = vector.broadcast %cst_37 : f32 to vector<8x4xf32>
    %86 = arith.mulf %84, %85 : vector<8x4xf32>
    %87 = vector.extract_strided_slice %3 {offsets = [0, 48], sizes = [8, 4], strides = [1, 1]} : vector<8x96xf32> to vector<8x4xf32>
    %88 = vector.extract_strided_slice %3 {offsets = [0, 80], sizes = [8, 4], strides = [1, 1]} : vector<8x96xf32> to vector<8x4xf32>
    %cst_38 = arith.constant dense<0.000000e+00> : vector<8x8xf32>
    %89 = tpu.matmul %86, %87, %cst_38 {dimension_numbers = #tpu.dot_dimension_numbers<[1], [1], [0], [0], [0, 0, 1, 0], [], []>} : vector<8x4xf32>, vector<8x4xf32>, vector<8x8xf32> -> vector<8x8xf32>
    %cst_39 = arith.constant dense<0xFF800000> : vector<8xf32>
    %90 = vector.multi_reduction <maximumf>, %89, %cst_39 [1] : vector<8x8xf32> to vector<8xf32>
    %91 = vector.shape_cast %90 : vector<8xf32> to vector<8x1xf32>
    %92 = vector.broadcast %91 : vector<8x1xf32> to vector<8x8xf32>
    %93 = arith.subf %89, %92 : vector<8x8xf32>
    %94 = math.exp %93 : vector<8x8xf32>
    %cst_40 = arith.constant dense<0.000000e+00> : vector<8xf32>
    %95 = vector.multi_reduction <add>, %94, %cst_40 [1] : vector<8x8xf32> to vector<8xf32>
    %96 = vector.shape_cast %95 : vector<8xf32> to vector<8x1xf32>
    %97 = tpu.reciprocal %96 {approx = true} : vector<8x1xf32> -> vector<8x1xf32>
    %98 = vector.broadcast %97 : vector<8x1xf32> to vector<8x8xf32>
    %99 = arith.mulf %94, %98 : vector<8x8xf32>
    %c0_41 = arith.constant 0 : index
    %c4 = arith.constant 4 : index
    %c0_42 = arith.constant 0 : index
    %c0_43 = arith.constant 0 : index
    %100 = vector.load %arg4[%c0_41, %c4, %c0_42, %c0_43] : memref<1x8x8x8xf32, #tpu.memory_space<vmem>>, vector<1x1x8x8xf32>
    %101 = vector.shape_cast %100 : vector<1x1x8x8xf32> to vector<8x8xf32>
    %102 = vector.shape_cast %99 : vector<8x8xf32> to vector<1x1x8x8xf32>
    tpu.vector_store %arg4[%c0_41, %c4, %c0_42, %c0_43], %102 {strides = array<i32>} : memref<1x8x8x8xf32, #tpu.memory_space<vmem>>, vector<1x1x8x8xf32>,
    %cst_44 = arith.constant dense<0.000000e+00> : vector<8x4xf32>
    %103 = tpu.matmul %99, %88, %cst_44 {dimension_numbers = #tpu.dot_dimension_numbers<[1], [0], [0], [1], [0, 0, 1, 1], [], []>} : vector<8x8xf32>, vector<8x4xf32>, vector<8x4xf32> -> vector<8x4xf32>
    %104 = vector.extract_strided_slice %3 {offsets = [0, 20], sizes = [8, 4], strides = [1, 1]} : vector<8x96xf32> to vector<8x4xf32>
    %cst_45 = arith.constant 5.000000e-01 : f32
    %105 = vector.broadcast %cst_45 : f32 to vector<8x4xf32>
    %106 = arith.mulf %104, %105 : vector<8x4xf32>
    %107 = vector.extract_strided_slice %3 {offsets = [0, 52], sizes = [8, 4], strides = [1, 1]} : vector<8x96xf32> to vector<8x4xf32>
    %108 = vector.extract_strided_slice %3 {offsets = [0, 84], sizes = [8, 4], strides = [1, 1]} : vector<8x96xf32> to vector<8x4xf32>
    %cst_46 = arith.constant dense<0.000000e+00> : vector<8x8xf32>
    %109 = tpu.matmul %106, %107, %cst_46 {dimension_numbers = #tpu.dot_dimension_numbers<[1], [1], [0], [0], [0, 0, 1, 0], [], []>} : vector<8x4xf32>, vector<8x4xf32>, vector<8x8xf32> -> vector<8x8xf32>
    %cst_47 = arith.constant dense<0xFF800000> : vector<8xf32>
    %110 = vector.multi_reduction <maximumf>, %109, %cst_47 [1] : vector<8x8xf32> to vector<8xf32>
    %111 = vector.shape_cast %110 : vector<8xf32> to vector<8x1xf32>
    %112 = vector.broadcast %111 : vector<8x1xf32> to vector<8x8xf32>
    %113 = arith.subf %109, %112 : vector<8x8xf32>
    %114 = math.exp %113 : vector<8x8xf32>
    %cst_48 = arith.constant dense<0.000000e+00> : vector<8xf32>
    %115 = vector.multi_reduction <add>, %114, %cst_48 [1] : vector<8x8xf32> to vector<8xf32>
    %116 = vector.shape_cast %115 : vector<8xf32> to vector<8x1xf32>
    %117 = tpu.reciprocal %116 {approx = true} : vector<8x1xf32> -> vector<8x1xf32>
    %118 = vector.broadcast %117 : vector<8x1xf32> to vector<8x8xf32>
    %119 = arith.mulf %114, %118 : vector<8x8xf32>
    %c0_49 = arith.constant 0 : index
    %c5 = arith.constant 5 : index
    %c0_50 = arith.constant 0 : index
    %c0_51 = arith.constant 0 : index
    %120 = vector.load %arg4[%c0_49, %c5, %c0_50, %c0_51] : memref<1x8x8x8xf32, #tpu.memory_space<vmem>>, vector<1x1x8x8xf32>
    %121 = vector.shape_cast %120 : vector<1x1x8x8xf32> to vector<8x8xf32>
    %122 = vector.shape_cast %119 : vector<8x8xf32> to vector<1x1x8x8xf32>
    tpu.vector_store %arg4[%c0_49, %c5, %c0_50, %c0_51], %122 {strides = array<i32>} : memref<1x8x8x8xf32, #tpu.memory_space<vmem>>, vector<1x1x8x8xf32>,
    %cst_52 = arith.constant dense<0.000000e+00> : vector<8x4xf32>
    %123 = tpu.matmul %119, %108, %cst_52 {dimension_numbers = #tpu.dot_dimension_numbers<[1], [0], [0], [1], [0, 0, 1, 1], [], []>} : vector<8x8xf32>, vector<8x4xf32>, vector<8x4xf32> -> vector<8x4xf32>
    %124 = vector.extract_strided_slice %3 {offsets = [0, 24], sizes = [8, 4], strides = [1, 1]} : vector<8x96xf32> to vector<8x4xf32>
    %cst_53 = arith.constant 5.000000e-01 : f32
    %125 = vector.broadcast %cst_53 : f32 to vector<8x4xf32>
    %126 = arith.mulf %124, %125 : vector<8x4xf32>
    %127 = vector.extract_strided_slice %3 {offsets = [0, 56], sizes = [8, 4], strides = [1, 1]} : vector<8x96xf32> to vector<8x4xf32>
    %128 = vector.extract_strided_slice %3 {offsets = [0, 88], sizes = [8, 4], strides = [1, 1]} : vector<8x96xf32> to vector<8x4xf32>
    %cst_54 = arith.constant dense<0.000000e+00> : vector<8x8xf32>
    %129 = tpu.matmul %126, %127, %cst_54 {dimension_numbers = #tpu.dot_dimension_numbers<[1], [1], [0], [0], [0, 0, 1, 0], [], []>} : vector<8x4xf32>, vector<8x4xf32>, vector<8x8xf32> -> vector<8x8xf32>
    %cst_55 = arith.constant dense<0xFF800000> : vector<8xf32>
    %130 = vector.multi_reduction <maximumf>, %129, %cst_55 [1] : vector<8x8xf32> to vector<8xf32>
    %131 = vector.shape_cast %130 : vector<8xf32> to vector<8x1xf32>
    %132 = vector.broadcast %131 : vector<8x1xf32> to vector<8x8xf32>
    %133 = arith.subf %129, %132 : vector<8x8xf32>
    %134 = math.exp %133 : vector<8x8xf32>
    %cst_56 = arith.constant dense<0.000000e+00> : vector<8xf32>
    %135 = vector.multi_reduction <add>, %134, %cst_56 [1] : vector<8x8xf32> to vector<8xf32>
    %136 = vector.shape_cast %135 : vector<8xf32> to vector<8x1xf32>
    %137 = tpu.reciprocal %136 {approx = true} : vector<8x1xf32> -> vector<8x1xf32>
    %138 = vector.broadcast %137 : vector<8x1xf32> to vector<8x8xf32>
    %139 = arith.mulf %134, %138 : vector<8x8xf32>
    %c0_57 = arith.constant 0 : index
    %c6 = arith.constant 6 : index
    %c0_58 = arith.constant 0 : index
    %c0_59 = arith.constant 0 : index
    %140 = vector.load %arg4[%c0_57, %c6, %c0_58, %c0_59] : memref<1x8x8x8xf32, #tpu.memory_space<vmem>>, vector<1x1x8x8xf32>
    %141 = vector.shape_cast %140 : vector<1x1x8x8xf32> to vector<8x8xf32>
    %142 = vector.shape_cast %139 : vector<8x8xf32> to vector<1x1x8x8xf32>
    tpu.vector_store %arg4[%c0_57, %c6, %c0_58, %c0_59], %142 {strides = array<i32>} : memref<1x8x8x8xf32, #tpu.memory_space<vmem>>, vector<1x1x8x8xf32>,
    %cst_60 = arith.constant dense<0.000000e+00> : vector<8x4xf32>
    %143 = tpu.matmul %139, %128, %cst_60 {dimension_numbers = #tpu.dot_dimension_numbers<[1], [0], [0], [1], [0, 0, 1, 1], [], []>} : vector<8x8xf32>, vector<8x4xf32>, vector<8x4xf32> -> vector<8x4xf32>
    %144 = vector.extract_strided_slice %3 {offsets = [0, 28], sizes = [8, 4], strides = [1, 1]} : vector<8x96xf32> to vector<8x4xf32>
    %cst_61 = arith.constant 5.000000e-01 : f32
    %145 = vector.broadcast %cst_61 : f32 to vector<8x4xf32>
    %146 = arith.mulf %144, %145 : vector<8x4xf32>
    %147 = vector.extract_strided_slice %3 {offsets = [0, 60], sizes = [8, 4], strides = [1, 1]} : vector<8x96xf32> to vector<8x4xf32>
    %148 = vector.extract_strided_slice %3 {offsets = [0, 92], sizes = [8, 4], strides = [1, 1]} : vector<8x96xf32> to vector<8x4xf32>
    %cst_62 = arith.constant dense<0.000000e+00> : vector<8x8xf32>
    %149 = tpu.matmul %146, %147, %cst_62 {dimension_numbers = #tpu.dot_dimension_numbers<[1], [1], [0], [0], [0, 0, 1, 0], [], []>} : vector<8x4xf32>, vector<8x4xf32>, vector<8x8xf32> -> vector<8x8xf32>
    %cst_63 = arith.constant dense<0xFF800000> : vector<8xf32>
    %150 = vector.multi_reduction <maximumf>, %149, %cst_63 [1] : vector<8x8xf32> to vector<8xf32>
    %151 = vector.shape_cast %150 : vector<8xf32> to vector<8x1xf32>
    %152 = vector.broadcast %151 : vector<8x1xf32> to vector<8x8xf32>
    %153 = arith.subf %149, %152 : vector<8x8xf32>
    %154 = math.exp %153 : vector<8x8xf32>
    %cst_64 = arith.constant dense<0.000000e+00> : vector<8xf32>
    %155 = vector.multi_reduction <add>, %154, %cst_64 [1] : vector<8x8xf32> to vector<8xf32>
    %156 = vector.shape_cast %155 : vector<8xf32> to vector<8x1xf32>
    %157 = tpu.reciprocal %156 {approx = true} : vector<8x1xf32> -> vector<8x1xf32>
    %158 = vector.broadcast %157 : vector<8x1xf32> to vector<8x8xf32>
    %159 = arith.mulf %154, %158 : vector<8x8xf32>
    %c0_65 = arith.constant 0 : index
    %c7 = arith.constant 7 : index
    %c0_66 = arith.constant 0 : index
    %c0_67 = arith.constant 0 : index
    %160 = vector.load %arg4[%c0_65, %c7, %c0_66, %c0_67] : memref<1x8x8x8xf32, #tpu.memory_space<vmem>>, vector<1x1x8x8xf32>
    %161 = vector.shape_cast %160 : vector<1x1x8x8xf32> to vector<8x8xf32>
    %162 = vector.shape_cast %159 : vector<8x8xf32> to vector<1x1x8x8xf32>
    tpu.vector_store %arg4[%c0_65, %c7, %c0_66, %c0_67], %162 {strides = array<i32>} : memref<1x8x8x8xf32, #tpu.memory_space<vmem>>, vector<1x1x8x8xf32>,
    %cst_68 = arith.constant dense<0.000000e+00> : vector<8x4xf32>
    %163 = tpu.matmul %159, %148, %cst_68 {dimension_numbers = #tpu.dot_dimension_numbers<[1], [0], [0], [1], [0, 0, 1, 1], [], []>} : vector<8x8xf32>, vector<8x4xf32>, vector<8x4xf32> -> vector<8x4xf32>
    %164 = tpu.concatenate %23, %43, %63, %83, %103, %123, %143, %163 in 1 : vector<8x4xf32>, vector<8x4xf32>, vector<8x4xf32>, vector<8x4xf32>, vector<8x4xf32>, vector<8x4xf32>, vector<8x4xf32>, vector<8x4xf32> -> vector<8x32xf32>
    %c0_69 = arith.constant 0 : index
    %c0_70 = arith.constant 0 : index
    %c0_71 = arith.constant 0 : index
    %165 = vector.load %arg3[%c0_69, %c0_70, %c0_71] : memref<1x8x32xf32, #tpu.memory_space<vmem>>, vector<1x8x32xf32>
    %166 = vector.shape_cast %165 : vector<1x8x32xf32> to vector<8x32xf32>
    %167 = vector.shape_cast %164 : vector<8x32xf32> to vector<1x8x32xf32>
    tpu.vector_store %arg3[%c0_69, %c0_70, %c0_71], %167 {strides = array<i32>} : memref<1x8x32xf32, #tpu.memory_space<vmem>>, vector<1x8x32xf32>,
    return
  }
  func.func @transform_0(%arg0: i32) -> (i32, i32, i32) {
    %c0_i32 = arith.constant 0 : i32
    %c0_i32_0 = arith.constant 0 : i32
    %c0_i32_1 = arith.constant 0 : i32
    return %arg0, %c0_i32, %c0_i32_0 : i32, i32, i32
  }
  func.func @transform_1(%arg0: i32) -> (i32, i32) {
    %c0_i32 = arith.constant 0 : i32
    %c0_i32_0 = arith.constant 0 : i32
    %c0_i32_1 = arith.constant 0 : i32
    return %c0_i32, %c0_i32_0 : i32, i32
  }
  func.func @transform_2(%arg0: i32) -> (i32, i32, i32) {
    %c0_i32 = arith.constant 0 : i32
    %c0_i32_0 = arith.constant 0 : i32
    %c0_i32_1 = arith.constant 0 : i32
    return %arg0, %c0_i32, %c0_i32_0 : i32, i32, i32
  }
  func.func @transform_3(%arg0: i32) -> (i32, i32, i32, i32) {
    %c0_i32 = arith.constant 0 : i32
    %c0_i32_0 = arith.constant 0 : i32
    %c0_i32_1 = arith.constant 0 : i32
    %c0_i32_2 = arith.constant 0 : i32
    return %arg0, %c0_i32, %c0_i32_0, %c0_i32_1 : i32, i32, i32, i32
  }
}

</mosaic_0001>

<llo_original>
// kernel: tpu_custom_call.1
$region0: #{tpu_custom_call.1}
  #allocation0 [shape = 'u32[]', space=smem, size = 0x4, offset = 0x4, fixed_abs, tag = 'smem constant byte address 0x4 - core index']
  #allocation1 [shape = 'u32[144,128]{1,0:T(1,128)}', space=vmem, size = 0x12000, scoped, tag = 'internal scratch']
  %s0 = inlined_call_operand.hbm [shape: f32[2,8,32], index: 0, kind: input, shape index: {}]
  %s1 = inlined_call_operand.hbm [shape: f32[32,96], index: 1, kind: input, shape index: {}]
  %s2 = inlined_call_operand.hbm [shape: f32[2,8,32], index: 2, kind: output, shape index: {0}]
  %s3 = inlined_call_operand.hbm [shape: f32[2,8,8,8], index: 3, kind: output, shape index: {1}]
  %4 = xla_tuple %s2, %s3
  %s5 = sld [smem:[#allocation0]]
  $region57: #{tpu_custom_call.1} parent=0
    _
  %s7 = ssub.s32 1, %s5
  %s8 = scalar_select 0, %s7, %s5
  $region1: #{tpu_custom_call.1} parent=0
    #allocation2 [shape = 'u8[8192]{0}', space=vmem, size = 0x2000, scoped, tag = 'input window, operand 0']
    #allocation3 [shape = 's32[2]{0}', space=sflag, size = 0x8, scoped, tag = 'scoped memory for tpu_custom_call.1']
    #allocation4 [shape = 's32[2]{0}', space=sflag, size = 0x8, scoped, tag = 'scoped memory for tpu_custom_call.1']
    #allocation5 [shape = 'u8[16384]{0}', space=vmem, size = 0x4000, scoped, tag = 'input window, operand 1, single buffered']
    #allocation6 [shape = 's32[1]{0}', space=sflag, size = 0x4, scoped, tag = 'scoped memory for tpu_custom_call.1']
    #allocation7 [shape = 'u8[8192]{0}', space=vmem, size = 0x2000, scoped, tag = 'output window, operand 0']
    #allocation8 [shape = 'u8[65536]{0}', space=vmem, size = 0x10000, scoped, tag = 'output window, operand 1']
    #allocation9 [shape = 's32[2]{0}', space=sflag, size = 0x8, scoped, tag = 'scoped memory for tpu_custom_call.1']
    %9 = vsyncpa [#allocation3], 0
    %s10 = scalar_lea.sflag [#allocation3], 1
    %11 = vsyncpa %s10, 0
    %12 = vsyncpa [#allocation6], 0
    %13 = vsyncpa [#allocation4], 0
    %s14 = scalar_lea.sflag [#allocation4], 1
    %15 = vsyncpa %s14, 0
    %16 = vsyncpa [#allocation9], 0
    %s17 = scalar_lea.sflag [#allocation9], 1
    %18 = vsyncpa %s17, 0
    loop: start=0, step=1, limit=4
    $region2: #{tpu_custom_call.1} parent=1 // loop_pre_header
      _
    $region3: #{tpu_custom_call.1} parent=1 // loop_header
      %s20 = sphi 0, %s24
      %p21 = scmp.ge.s32.totalorder %s20, 4
      %s30 = sphi 0, %s32
      %s33 = sphi 0, %s30
      %s34 = sphi 0, %s33
      %s50 = sphi 0, %s34
      %s54 = sphi 0, %s54
      %s56 = sphi 0, %s54
      %s57 = sphi 0, %s56
      %s71 = sphi 0, %s57
      %s77 = sphi 0, %s79
      %s80 = sphi 0, %s77
      %s81 = sphi 0, %s80
      %s97 = sphi 0, %s81
      %s103 = sphi 0, %s105
      %s106 = sphi 0, %s103
      %s107 = sphi 0, %s106
      %s123 = sphi 0, %s107
    $region4: #{tpu_custom_call.1} parent=1 // loop_header_branch
      %23 = sbr.rel (%p21) target = $region8
    $region5: #{tpu_custom_call.1} parent=1 // loop_body
      %s25 = ssub.s32 %s20, 1
      %s26 = ssub.s32 %s20, 2
      %s27 = sadd.s32 %s20, 1
      %s28 = ssub.s32 %s20, %s27
      %p29 = scmp.eq.s32.totalorder %s28, 0
      %s31 = sadd.s32 %s30, 1
      %s32 = scalar_select %p29, %s30, %s31
      %p35 = pneg %p29
      %p36 = scmp.eq.s32.totalorder %s20, 1
      %p37 = por %p35, %p36
      %p38 = scmp.ne.s32.totalorder %s30, %s33
      %p39 = scmp.eq.s32.totalorder %s20, 0
      %p40 = por %p38, %p39
      %p41 = scmp.ne.s32.totalorder %s30, %s33
      %p42 = scmp.eq.s32.totalorder %s25, 1
      %p43 = por %p41, %p42
      %p44 = scmp.ne.s32.totalorder %s33, %s34
      %p45 = scmp.eq.s32.totalorder %s25, 0
      %p46 = por %p44, %p45
      %p47 = scmp.ne.s32.totalorder %s33, %s34
      %p48 = scmp.eq.s32.totalorder %s26, 1
      %p49 = por %p47, %p48
      %p51 = scmp.ne.s32.totalorder %s34, %s50
      %p52 = scmp.eq.s32.totalorder %s26, 0
      %p53 = por %p51, %p52
      %s55 = sadd.s32 %s54, 1
      %p58 = scmp.eq.s32.totalorder %s20, 1
      %p59 = scmp.ne.s32.totalorder %s54, %s56
      %p60 = scmp.eq.s32.totalorder %s20, 0
      %p61 = por %p59, %p60
      %p62 = scmp.ne.s32.totalorder %s54, %s56
      %p63 = scmp.eq.s32.totalorder %s25, 1
      %p64 = por %p62, %p63
      %p65 = scmp.ne.s32.totalorder %s56, %s57
      %p66 = scmp.eq.s32.totalorder %s25, 0
      %p67 = por %p65, %p66
      %p68 = scmp.ne.s32.totalorder %s56, %s57
      %p69 = scmp.eq.s32.totalorder %s26, 1
      %p70 = por %p68, %p69
      %p72 = scmp.ne.s32.totalorder %s57, %s71
      %p73 = scmp.eq.s32.totalorder %s26, 0
      %p74 = por %p72, %p73
      %s75 = ssub.s32 %s20, %s27
      %p76 = scmp.eq.s32.totalorder %s75, 0
      %s78 = sadd.s32 %s77, 1
      %s79 = scalar_select %p76, %s77, %s78
      %p82 = pneg %p76
      %p83 = scmp.eq.s32.totalorder %s20, 1
      %p84 = por %p82, %p83
      %p85 = scmp.ne.s32.totalorder %s77, %s80
      %p86 = scmp.eq.s32.totalorder %s20, 0
      %p87 = por %p85, %p86
      %p88 = scmp.ne.s32.totalorder %s77, %s80
      %p89 = scmp.eq.s32.totalorder %s25, 1
      %p90 = por %p88, %p89
      %p91 = scmp.ne.s32.totalorder %s80, %s81
      %p92 = scmp.eq.s32.totalorder %s25, 0
      %p93 = por %p91, %p92
      %p94 = scmp.ne.s32.totalorder %s80, %s81
      %p95 = scmp.eq.s32.totalorder %s26, 1
      %p96 = por %p94, %p95
      %p98 = scmp.ne.s32.totalorder %s81, %s97
      %p99 = scmp.eq.s32.totalorder %s26, 0
      %p100 = por %p98, %p99
      %s101 = ssub.s32 %s20, %s27
      %p102 = scmp.eq.s32.totalorder %s101, 0
      %s104 = sadd.s32 %s103, 1
      %s105 = scalar_select %p102, %s103, %s104
      %p108 = pneg %p102
      %p109 = scmp.eq.s32.totalorder %s20, 1
      %p110 = por %p108, %p109
      %p111 = scmp.ne.s32.totalorder %s103, %s106
      %p112 = scmp.eq.s32.totalorder %s20, 0
      %p113 = por %p111, %p112
      %p114 = scmp.ne.s32.totalorder %s103, %s106
      %p115 = scmp.eq.s32.totalorder %s25, 1
      %p116 = por %p114, %p115
      %p117 = scmp.ne.s32.totalorder %s106, %s107
      %p118 = scmp.eq.s32.totalorder %s25, 0
      %p119 = por %p117, %p118
      %p120 = scmp.ne.s32.totalorder %s106, %s107
      %p121 = scmp.eq.s32.totalorder %s26, 1
      %p122 = por %p120, %p121
      %p124 = scmp.ne.s32.totalorder %s107, %s123
      %p125 = scmp.eq.s32.totalorder %s26, 0
      %p126 = por %p124, %p125
      %p127 = scmp.le.s32.totalorder 1, %s20
      %p128 = scmp.lt.s32.totalorder %s20, 3
      %p129 = pnand %p127, %p128
      %p130 = pneg %p129
      // Predicated region
      $region9: #{tpu_custom_call.1} parent=5 // pred_check
        _
      $region10: #{tpu_custom_call.1} parent=5 // pred_check_branch
        %132 = sbr.rel (%p129) target = $region12
      $region11: #{tpu_custom_call.1} parent=5 // pred_region
        %s133 = ssub.s32 %s20, 1
        // Predicated region
        $region13: #{tpu_custom_call.1} parent=11 // pred_check
          %p134 = pneg %p67
        $region14: #{tpu_custom_call.1} parent=11 // pred_check_branch
          %136 = sbr.rel (%p134) target = $region16
        $region15: #{tpu_custom_call.1} parent=11 // pred_region
          %s138 = ssub.s32 512, 512
          %139 = vsyncadd [#allocation6], %s138
          %s140 = sshll.u32 [#allocation5], 4
          %s141 = int_to_ptr.vmem [resolvable:$true] %s140
          %146 = dma.hbm_to_vmem [thread:$0]  %s1, 512, %s141, [#allocation6], 128, 128, 8
        $region16: #{tpu_custom_call.1} parent=11 // pred_fallthru
          _
      $region12: #{tpu_custom_call.1} parent=5 // pred_fallthru
        _
      %p147 = scmp.lt.s32.totalorder %s20, 2
      // Predicated region
      $region17: #{tpu_custom_call.1} parent=5 // pred_check
        %p148 = pneg %p147
      $region18: #{tpu_custom_call.1} parent=5 // pred_check_branch
        %150 = sbr.rel (%p148) target = $region20
      $region19: #{tpu_custom_call.1} parent=5 // pred_region
        // Predicated region
        $region21: #{tpu_custom_call.1} parent=19 // pred_check
          %p151 = pneg %p40
        $region22: #{tpu_custom_call.1} parent=19 // pred_check_branch
          %153 = sbr.rel (%p151) target = $region24
        $region23: #{tpu_custom_call.1} parent=19 // pred_region
          %s154 = sand.u32 %s30, 1
          %s155 = scalar_lea.sflag [#allocation3], %s154
          %s156 = sand.u32 %s30, 1
          %s157 = smul.addr %s156, 8
          %s158 = scalar_lea.vmem [#allocation2], %s157
          %s160 = ssub.s32 128, 128
          %161 = vsyncadd %s155, %s160
          %s162 = smul.addr %s20, 128
          %s163 = scalar_lea.hbm %s0, %s162
          %s165 = sshll.u32 %s158, 4
          %s166 = int_to_ptr.vmem [resolvable:$true] %s165
          %168 = dma.hbm_to_vmem [thread:$0]  %s163, 128, %s166, %s155
        $region24: #{tpu_custom_call.1} parent=19 // pred_fallthru
          _
      $region20: #{tpu_custom_call.1} parent=5 // pred_fallthru
        _
      %p169 = scmp.le.s32.totalorder 1, %s20
      %p170 = scmp.lt.s32.totalorder %s20, 3
      %p171 = pnand %p169, %p170
      %p172 = pneg %p171
      // Predicated region
      $region25: #{tpu_custom_call.1} parent=5 // pred_check
        _
      $region26: #{tpu_custom_call.1} parent=5 // pred_check_branch
        %174 = sbr.rel (%p171) target = $region28
      $region27: #{tpu_custom_call.1} parent=5 // pred_region
        %s175 = ssub.s32 %s20, 1
        %s176 = sand.u32 %s33, 1
        %s177 = scalar_lea.sflag [#allocation3], %s176
        %s178 = sand.u32 %s33, 1
        %s179 = smul.addr %s178, 8
        %s180 = scalar_lea.vmem [#allocation2], %s179
        // Predicated region
        $region29: #{tpu_custom_call.1} parent=27 // pred_check
          %p181 = pneg %p46
        $region30: #{tpu_custom_call.1} parent=27 // pred_check_branch
          %183 = sbr.rel (%p181) target = $region32
        $region31: #{tpu_custom_call.1} parent=27 // pred_region
          %184 = dma.done %s177, 128
        $region32: #{tpu_custom_call.1} parent=27 // pred_fallthru
          _
        // Predicated region
        $region33: #{tpu_custom_call.1} parent=27 // pred_check
          %p185 = pneg %p67
        $region34: #{tpu_custom_call.1} parent=27 // pred_check_branch
          %187 = sbr.rel (%p185) target = $region36
        $region35: #{tpu_custom_call.1} parent=27 // pred_region
          %188 = dma.done [#allocation6], 512
        $region36: #{tpu_custom_call.1} parent=27 // pred_fallthru
          _
        %s189 = sand.u32 %s33, 1
        %s190 = scalar_lea.sflag [#allocation3], %s189
        %s191 = sand.u32 %s33, 1
        %s192 = smul.addr %s191, 8
        %s193 = scalar_lea.vmem [#allocation2], %s192
        %p194 = pneg %p46
        %p195 = pneg %p43
        %p196 = pneg %p67
        %p197 = pneg %p64
        %p198 = pneg %p93
        %p199 = pneg %p90
        %s200 = sand.u32 %s80, 1
        %s201 = scalar_lea.sflag [#allocation4], %s200
        %s202 = sand.u32 %s80, 1
        %s203 = smul.addr %s202, 8
        %s204 = scalar_lea.vmem [#allocation7], %s203
        %p205 = pneg %p119
        %p206 = pneg %p116
        %s207 = sand.u32 %s106, 1
        %s208 = scalar_lea.sflag [#allocation9], %s207
        %s209 = sand.u32 %s106, 1
        %s210 = smul.addr %s209, 64
        %s211 = scalar_lea.vmem [#allocation8], %s210
        %v212 = vld [vmem:[%s180] sm:$0xff]
        %v213 = vld [vmem:[#allocation5] sm:$0xff]
        %v214 = vld [vmem:[#allocation5 + $0x8] sm:$0xff]
        %v215 = vld [vmem:[#allocation5 + $0x10] sm:$0xff]
        %v216 = vld [vmem:[#allocation5 + $0x18] sm:$0xff]
        %vm217 = vcmask 261120
        %v219 = vsel %vm217, %v212, 0
        %221 = vmatprep.subr.mxu0 0.0
        %222 = vmatpush1.msra.mxu0 %v213
        %223 = vmatprep.subr.mxu0 0.0
        %224 = vmatpush1.msra.mxu0 %v214
        %225 = vmatprep.subr.mxu0 0.0
        %226 = vmatpush1.msra.mxu0 %v215
        %227 = vmatprep.subr.mxu0 0.0
        %228 = vmatpush1.msra.mxu0 %v216
        %229 = vmatprep.subr.mxu0 0.0
        %230 = vmatpush1.msra.mxu0 0.0
        %231 = vmatprep.subr.mxu0 0.0
        %232 = vmatpush1.msra.mxu0 0.0
        %233 = vmatprep.subr.mxu0 0.0
        %234 = vmatpush1.msra.mxu0 0.0
        %235 = vmatprep.subr.mxu0 0.0
        %236 = vmatpush1.msra.mxu0 0.0
        %237 = vmatprep.subr.mxu0 0.0
        %238 = vmatpush1.msra.mxu0 0.0
        %239 = vmatprep.subr.mxu0 0.0
        %240 = vmatpush1.msra.mxu0 0.0
        %241 = vmatprep.subr.mxu0 0.0
        %242 = vmatpush1.msra.mxu0 0.0
        %243 = vmatprep.subr.mxu0 0.0
        %244 = vmatpush1.msra.mxu0 0.0
        %245 = vmatprep.subr.mxu0 0.0
        %246 = vmatpush1.msra.mxu0 0.0
        %247 = vmatprep.subr.mxu0 0.0
        %248 = vmatpush1.msra.mxu0 0.0
        %249 = vmatprep.subr.mxu0 0.0
        %250 = vmatpush1.msra.mxu0 0.0
        %251 = vmatprep.subr.mxu0 0.0
        %252 = vmatpush1.msra.mxu0 0.0
        %253 = vmatprep.subr.mxu0 0.0
        %254 = vmatpush1.msra.mxu0 0.0
        %255 = vmatprep.subr.mxu0 0.0
        %256 = vmatpush1.msra.mxu0 0.0
        %257 = vmatprep.subr.mxu0 0.0
        %258 = vmatpush1.msra.mxu0 0.0
        %259 = vmatprep.subr.mxu0 0.0
        %260 = vmatpush1.msra.mxu0 0.0
        %261 = vmatprep.subr.mxu0 0.0
        %262 = vmatpush1.msra.mxu0 0.0
        %263 = vmatprep.subr.mxu0 0.0
        %264 = vmatpush1.msra.mxu0 0.0
        %265 = vmatprep.subr.mxu0 0.0
        %266 = vmatpush1.msra.mxu0 0.0
        %267 = vmatprep.subr.mxu0 0.0
        %268 = vmatpush1.msra.mxu0 0.0
        %269 = vmatprep.subr.mxu0 0.0
        %270 = vmatpush1.msra.mxu0 0.0
        %271 = vmatprep.subr.mxu0 0.0
        %272 = vmatpush1.msra.mxu0 0.0
        %273 = vmatprep.subr.mxu0 0.0
        %274 = vmatpush1.msra.mxu0 0.0
        %275 = vmatprep.subr.mxu0 0.0
        %276 = vmatpush1.msra.mxu0 0.0
        %277 = vmatprep.subr.mxu0 0.0
        %278 = vmatpush1.msra.mxu0 0.0
        %279 = vmatprep.subr.mxu0 0.0
        %280 = vmatpush1.msra.mxu0 0.0
        %281 = vmatprep.subr.mxu0 0.0
        %282 = vmatpush1.msra.mxu0 0.0
        %283 = vmatprep.subr.mxu0 0.0
        %284 = vmatpush1.msra.mxu0 0.0
        %285 = vmatprep.mubr.f32.mxu0 0.0
        %286 = vmatmul.mubr.f32.gmra.mrb[0].mxu0 %v219
        %v287 = vpop.f32.mrb[0].mxu0
        %v288 = vadd.f32 0.0, %v287
        %v289 = vpop.f32.mrb[0].mxu0
        %290 = vdwg.mxu0
        %v291 = vmul.f32 %v288, 0.5
        %293 = vrot.lane.b32.xlu0 %v288, 96
        %v294 = vpop.permute.xlu0 %293
        %vm295 = vcmask 31744
        %v297 = vsel %vm295, %v291, 0
        %v299 = vsel %vm295, %v294, 0
        %301 = vmatprep.subr.mxu0 0.0
        %302 = vmatpush1.xpose.msra.mxu0 %v299
        %303 = vmatprep.subr.mxu0 0.0
        %304 = vmatpush1.xpose.msra.mxu0 0.0
        %305 = vmatprep.subr.mxu0 0.0
        %306 = vmatpush1.xpose.msra.mxu0 0.0
        %307 = vmatprep.subr.mxu0 0.0
        %308 = vmatpush1.xpose.msra.mxu0 0.0
        %309 = vmatprep.subr.mxu0 0.0
        %310 = vmatpush1.xpose.msra.mxu0 0.0
        %311 = vmatprep.subr.mxu0 0.0
        %312 = vmatpush1.xpose.msra.mxu0 0.0
        %313 = vmatprep.subr.mxu0 0.0
        %314 = vmatpush1.xpose.msra.mxu0 0.0
        %315 = vmatprep.subr.mxu0 0.0
        %316 = vmatpush1.xpose.msra.mxu0 0.0
        %317 = vmatprep.subr.mxu0 0.0
        %318 = vmatpush1.xpose.msra.mxu0 0.0
        %319 = vmatprep.subr.mxu0 0.0
        %320 = vmatpush1.xpose.msra.mxu0 0.0
        %321 = vmatprep.subr.mxu0 0.0
        %322 = vmatpush1.xpose.msra.mxu0 0.0
        %323 = vmatprep.subr.mxu0 0.0
        %324 = vmatpush1.xpose.msra.mxu0 0.0
        %325 = vmatprep.subr.mxu0 0.0
        %326 = vmatpush1.xpose.msra.mxu0 0.0
        %327 = vmatprep.subr.mxu0 0.0
        %328 = vmatpush1.xpose.msra.mxu0 0.0
        %329 = vmatprep.subr.mxu0 0.0
        %330 = vmatpush1.xpose.msra.mxu0 0.0
        %331 = vmatprep.subr.mxu0 0.0
        %332 = vmatpush1.xpose.msra.mxu0 0.0
        %333 = vmatprep.subr.mxu0 0.0
        %334 = vmatpush1.xpose.msra.mxu0 0.0
        %335 = vmatprep.subr.mxu0 0.0
        %336 = vmatpush1.xpose.msra.mxu0 0.0
        %337 = vmatprep.subr.mxu0 0.0
        %338 = vmatpush1.xpose.msra.mxu0 0.0
        %339 = vmatprep.subr.mxu0 0.0
        %340 = vmatpush1.xpose.msra.mxu0 0.0
        %341 = vmatprep.subr.mxu0 0.0
        %342 = vmatpush1.xpose.msra.mxu0 0.0
        %343 = vmatprep.subr.mxu0 0.0
        %344 = vmatpush1.xpose.msra.mxu0 0.0
        %345 = vmatprep.subr.mxu0 0.0
        %346 = vmatpush1.xpose.msra.mxu0 0.0
        %347 = vmatprep.subr.mxu0 0.0
        %348 = vmatpush1.xpose.msra.mxu0 0.0
        %349 = vmatprep.subr.mxu0 0.0
        %350 = vmatpush1.xpose.msra.mxu0 0.0
        %351 = vmatprep.subr.mxu0 0.0
        %352 = vmatpush1.xpose.msra.mxu0 0.0
        %353 = vmatprep.subr.mxu0 0.0
        %354 = vmatpush1.xpose.msra.mxu0 0.0
        %355 = vmatprep.subr.mxu0 0.0
        %356 = vmatpush1.xpose.msra.mxu0 0.0
        %357 = vmatprep.subr.mxu0 0.0
        %358 = vmatpush1.xpose.msra.mxu0 0.0
        %359 = vmatprep.subr.mxu0 0.0
        %360 = vmatpush1.xpose.msra.mxu0 0.0
        %361 = vmatprep.subr.mxu0 0.0
        %362 = vmatpush1.xpose.msra.mxu0 0.0
        %363 = vmatprep.subr.mxu0 0.0
        %364 = vmatpush1.xpose.msra.mxu0 0.0
        %365 = vmatprep.mubr.f32.mxu0 0.0
        %366 = vmatmul.mubr.f32.gmra.mrb[0].mxu0 %v297
        %v367 = vpop.f32.mrb[0].mxu0
        %v368 = vadd.f32 0.0, %v367
        %v369 = vpop.f32.mrb[0].mxu0
        %370 = vdwg.mxu0
        %vm371 = vcmask 64512
        %v372 = vsel %vm371, %v368, -inf
        %373 = vmax.xlane.f32.xlu0 %v372
        %v374 = vpop.xlane.xlu0 %373
        %v375 = vsub.f32 %v368, %v374
        %v376 = vmul.f32 %v375, 1.442695
        %v377 = vpow.pop %v376
        %v378 = vsel %vm371, %v377, 0.0
        %379 = vadd.xlane.f32.xlu0 %v378
        %v380 = vpop.xlane.xlu0 %379
        %v381 = vrcp.pop %v380
        %v382 = vmul.f32 %v377, %v381
        %383 = vst.msk [vmem:[%s211] sm:$0xff] %vm371, %v382
        %384 = vrot.lane.b32.xlu0 %v288, 64
        %v385 = vpop.permute.xlu0 %384
        %v388 = vsel %vm371, %v382, 0
        %390 = vmatprep.subr.mxu0 0.0
        %391 = vmatpush1.msra.mxu0 %v385
        %392 = vmatprep.subr.mxu0 0.0
        %393 = vmatpush1.msra.mxu0 0.0
        %394 = vmatprep.subr.mxu0 0.0
        %395 = vmatpush1.msra.mxu0 0.0
        %396 = vmatprep.subr.mxu0 0.0
        %397 = vmatpush1.msra.mxu0 0.0
        %398 = vmatprep.subr.mxu0 0.0
        %399 = vmatpush1.msra.mxu0 0.0
        %400 = vmatprep.subr.mxu0 0.0
        %401 = vmatpush1.msra.mxu0 0.0
        %402 = vmatprep.subr.mxu0 0.0
        %403 = vmatpush1.msra.mxu0 0.0
        %404 = vmatprep.subr.mxu0 0.0
        %405 = vmatpush1.msra.mxu0 0.0
        %406 = vmatprep.subr.mxu0 0.0
        %407 = vmatpush1.msra.mxu0 0.0
        %408 = vmatprep.subr.mxu0 0.0
        %409 = vmatpush1.msra.mxu0 0.0
        %410 = vmatprep.subr.mxu0 0.0
        %411 = vmatpush1.msra.mxu0 0.0
        %412 = vmatprep.subr.mxu0 0.0
        %413 = vmatpush1.msra.mxu0 0.0
        %414 = vmatprep.subr.mxu0 0.0
        %415 = vmatpush1.msra.mxu0 0.0
        %416 = vmatprep.subr.mxu0 0.0
        %417 = vmatpush1.msra.mxu0 0.0
        %418 = vmatprep.subr.mxu0 0.0
        %419 = vmatpush1.msra.mxu0 0.0
        %420 = vmatprep.subr.mxu0 0.0
        %421 = vmatpush1.msra.mxu0 0.0
        %422 = vmatprep.subr.mxu0 0.0
        %423 = vmatpush1.msra.mxu0 0.0
        %424 = vmatprep.subr.mxu0 0.0
        %425 = vmatpush1.msra.mxu0 0.0
        %426 = vmatprep.subr.mxu0 0.0
        %427 = vmatpush1.msra.mxu0 0.0
        %428 = vmatprep.subr.mxu0 0.0
        %429 = vmatpush1.msra.mxu0 0.0
        %430 = vmatprep.subr.mxu0 0.0
        %431 = vmatpush1.msra.mxu0 0.0
        %432 = vmatprep.subr.mxu0 0.0
        %433 = vmatpush1.msra.mxu0 0.0
        %434 = vmatprep.subr.mxu0 0.0
        %435 = vmatpush1.msra.mxu0 0.0
        %436 = vmatprep.subr.mxu0 0.0
        %437 = vmatpush1.msra.mxu0 0.0
        %438 = vmatprep.subr.mxu0 0.0
        %439 = vmatpush1.msra.mxu0 0.0
        %440 = vmatprep.subr.mxu0 0.0
        %441 = vmatpush1.msra.mxu0 0.0
        %442 = vmatprep.subr.mxu0 0.0
        %443 = vmatpush1.msra.mxu0 0.0
        %444 = vmatprep.subr.mxu0 0.0
        %445 = vmatpush1.msra.mxu0 0.0
        %446 = vmatprep.subr.mxu0 0.0
        %447 = vmatpush1.msra.mxu0 0.0
        %448 = vmatprep.subr.mxu0 0.0
        %449 = vmatpush1.msra.mxu0 0.0
        %450 = vmatprep.subr.mxu0 0.0
        %451 = vmatpush1.msra.mxu0 0.0
        %452 = vmatprep.subr.mxu0 0.0
        %453 = vmatpush1.msra.mxu0 0.0
        %454 = vmatprep.mubr.f32.mxu0 0.0
        %455 = vmatmul.mubr.f32.gmra.mrb[0].mxu0 %v388
        %v456 = vpop.f32.mrb[0].mxu0
        %v457 = vadd.f32 0.0, %v456
        %v458 = vpop.f32.mrb[0].mxu0
        %459 = vdwg.mxu0
        %460 = vrot.lane.b32.xlu0 %v291, 124
        %v461 = vpop.permute.xlu0 %460
        %462 = vrot.lane.b32.xlu0 %v288, 92
        %v463 = vpop.permute.xlu0 %462
        %v464 = vsel %vm295, %v461, 0
        %v466 = vsel %vm295, %v463, 0
        %468 = vmatprep.subr.mxu0 0.0
        %469 = vmatpush1.xpose.msra.mxu0 %v466
        %470 = vmatprep.subr.mxu0 0.0
        %471 = vmatpush1.xpose.msra.mxu0 0.0
        %472 = vmatprep.subr.mxu0 0.0
        %473 = vmatpush1.xpose.msra.mxu0 0.0
        %474 = vmatprep.subr.mxu0 0.0
        %475 = vmatpush1.xpose.msra.mxu0 0.0
        %476 = vmatprep.subr.mxu0 0.0
        %477 = vmatpush1.xpose.msra.mxu0 0.0
        %478 = vmatprep.subr.mxu0 0.0
        %479 = vmatpush1.xpose.msra.mxu0 0.0
        %480 = vmatprep.subr.mxu0 0.0
        %481 = vmatpush1.xpose.msra.mxu0 0.0
        %482 = vmatprep.subr.mxu0 0.0
        %483 = vmatpush1.xpose.msra.mxu0 0.0
        %484 = vmatprep.subr.mxu0 0.0
        %485 = vmatpush1.xpose.msra.mxu0 0.0
        %486 = vmatprep.subr.mxu0 0.0
        %487 = vmatpush1.xpose.msra.mxu0 0.0
        %488 = vmatprep.subr.mxu0 0.0
        %489 = vmatpush1.xpose.msra.mxu0 0.0
        %490 = vmatprep.subr.mxu0 0.0
        %491 = vmatpush1.xpose.msra.mxu0 0.0
        %492 = vmatprep.subr.mxu0 0.0
        %493 = vmatpush1.xpose.msra.mxu0 0.0
        %494 = vmatprep.subr.mxu0 0.0
        %495 = vmatpush1.xpose.msra.mxu0 0.0
        %496 = vmatprep.subr.mxu0 0.0
        %497 = vmatpush1.xpose.msra.mxu0 0.0
        %498 = vmatprep.subr.mxu0 0.0
        %499 = vmatpush1.xpose.msra.mxu0 0.0
        %500 = vmatprep.subr.mxu0 0.0
        %501 = vmatpush1.xpose.msra.mxu0 0.0
        %502 = vmatprep.subr.mxu0 0.0
        %503 = vmatpush1.xpose.msra.mxu0 0.0
        %504 = vmatprep.subr.mxu0 0.0
        %505 = vmatpush1.xpose.msra.mxu0 0.0
        %506 = vmatprep.subr.mxu0 0.0
        %507 = vmatpush1.xpose.msra.mxu0 0.0
        %508 = vmatprep.subr.mxu0 0.0
        %509 = vmatpush1.xpose.msra.mxu0 0.0
        %510 = vmatprep.subr.mxu0 0.0
        %511 = vmatpush1.xpose.msra.mxu0 0.0
        %512 = vmatprep.subr.mxu0 0.0
        %513 = vmatpush1.xpose.msra.mxu0 0.0
        %514 = vmatprep.subr.mxu0 0.0
        %515 = vmatpush1.xpose.msra.mxu0 0.0
        %516 = vmatprep.subr.mxu0 0.0
        %517 = vmatpush1.xpose.msra.mxu0 0.0
        %518 = vmatprep.subr.mxu0 0.0
        %519 = vmatpush1.xpose.msra.mxu0 0.0
        %520 = vmatprep.subr.mxu0 0.0
        %521 = vmatpush1.xpose.msra.mxu0 0.0
        %522 = vmatprep.subr.mxu0 0.0
        %523 = vmatpush1.xpose.msra.mxu0 0.0
        %524 = vmatprep.subr.mxu0 0.0
        %525 = vmatpush1.xpose.msra.mxu0 0.0
        %526 = vmatprep.subr.mxu0 0.0
        %527 = vmatpush1.xpose.msra.mxu0 0.0
        %528 = vmatprep.subr.mxu0 0.0
        %529 = vmatpush1.xpose.msra.mxu0 0.0
        %530 = vmatprep.subr.mxu0 0.0
        %531 = vmatpush1.xpose.msra.mxu0 0.0
        %532 = vmatprep.mubr.f32.mxu0 0.0
        %533 = vmatmul.mubr.f32.gmra.mrb[0].mxu0 %v464
        %v534 = vpop.f32.mrb[0].mxu0
        %v535 = vadd.f32 0.0, %v534
        %v536 = vpop.f32.mrb[0].mxu0
        %537 = vdwg.mxu0
        %v538 = vsel %vm371, %v535, -inf
        %539 = vmax.xlane.f32.xlu0 %v538
        %v540 = vpop.xlane.xlu0 %539
        %v541 = vsub.f32 %v535, %v540
        %v542 = vmul.f32 %v541, 1.442695
        %v543 = vpow.pop %v542
        %v544 = vsel %vm371, %v543, 0.0
        %545 = vadd.xlane.f32.xlu0 %v544
        %v546 = vpop.xlane.xlu0 %545
        %v547 = vrcp.pop %v546
        %v548 = vmul.f32 %v543, %v547
        %s549 = scalar_lea.vmem %s211, 8 [#allocation8]
        %550 = vst.msk [vmem:[%s549] sm:$0xff] %vm371, %v548
        %551 = vrot.lane.b32.xlu0 %v288, 60
        %v552 = vpop.permute.xlu0 %551
        %v555 = vsel %vm371, %v548, 0
        %557 = vmatprep.subr.mxu0 0.0
        %558 = vmatpush1.msra.mxu0 %v552
        %559 = vmatprep.subr.mxu0 0.0
        %560 = vmatpush1.msra.mxu0 0.0
        %561 = vmatprep.subr.mxu0 0.0
        %562 = vmatpush1.msra.mxu0 0.0
        %563 = vmatprep.subr.mxu0 0.0
        %564 = vmatpush1.msra.mxu0 0.0
        %565 = vmatprep.subr.mxu0 0.0
        %566 = vmatpush1.msra.mxu0 0.0
        %567 = vmatprep.subr.mxu0 0.0
        %568 = vmatpush1.msra.mxu0 0.0
        %569 = vmatprep.subr.mxu0 0.0
        %570 = vmatpush1.msra.mxu0 0.0
        %571 = vmatprep.subr.mxu0 0.0
        %572 = vmatpush1.msra.mxu0 0.0
        %573 = vmatprep.subr.mxu0 0.0
        %574 = vmatpush1.msra.mxu0 0.0
        %575 = vmatprep.subr.mxu0 0.0
        %576 = vmatpush1.msra.mxu0 0.0
        %577 = vmatprep.subr.mxu0 0.0
        %578 = vmatpush1.msra.mxu0 0.0
        %579 = vmatprep.subr.mxu0 0.0
        %580 = vmatpush1.msra.mxu0 0.0
        %581 = vmatprep.subr.mxu0 0.0
        %582 = vmatpush1.msra.mxu0 0.0
        %583 = vmatprep.subr.mxu0 0.0
        %584 = vmatpush1.msra.mxu0 0.0
        %585 = vmatprep.subr.mxu0 0.0
        %586 = vmatpush1.msra.mxu0 0.0
        %587 = vmatprep.subr.mxu0 0.0
        %588 = vmatpush1.msra.mxu0 0.0
        %589 = vmatprep.subr.mxu0 0.0
        %590 = vmatpush1.msra.mxu0 0.0
        %591 = vmatprep.subr.mxu0 0.0
        %592 = vmatpush1.msra.mxu0 0.0
        %593 = vmatprep.subr.mxu0 0.0
        %594 = vmatpush1.msra.mxu0 0.0
        %595 = vmatprep.subr.mxu0 0.0
        %596 = vmatpush1.msra.mxu0 0.0
        %597 = vmatprep.subr.mxu0 0.0
        %598 = vmatpush1.msra.mxu0 0.0
        %599 = vmatprep.subr.mxu0 0.0
        %600 = vmatpush1.msra.mxu0 0.0
        %601 = vmatprep.subr.mxu0 0.0
        %602 = vmatpush1.msra.mxu0 0.0
        %603 = vmatprep.subr.mxu0 0.0
        %604 = vmatpush1.msra.mxu0 0.0
        %605 = vmatprep.subr.mxu0 0.0
        %606 = vmatpush1.msra.mxu0 0.0
        %607 = vmatprep.subr.mxu0 0.0
        %608 = vmatpush1.msra.mxu0 0.0
        %609 = vmatprep.subr.mxu0 0.0
        %610 = vmatpush1.msra.mxu0 0.0
        %611 = vmatprep.subr.mxu0 0.0
        %612 = vmatpush1.msra.mxu0 0.0
        %613 = vmatprep.subr.mxu0 0.0
        %614 = vmatpush1.msra.mxu0 0.0
        %615 = vmatprep.subr.mxu0 0.0
        %616 = vmatpush1.msra.mxu0 0.0
        %617 = vmatprep.subr.mxu0 0.0
        %618 = vmatpush1.msra.mxu0 0.0
        %619 = vmatprep.subr.mxu0 0.0
        %620 = vmatpush1.msra.mxu0 0.0
        %621 = vmatprep.mubr.f32.mxu0 0.0
        %622 = vmatmul.mubr.f32.gmra.mrb[0].mxu0 %v555
        %v623 = vpop.f32.mrb[0].mxu0
        %v624 = vadd.f32 0.0, %v623
        %v625 = vpop.f32.mrb[0].mxu0
        %626 = vdwg.mxu0
        %627 = vrot.lane.b32.xlu0 %v291, 120
        %v628 = vpop.permute.xlu0 %627
        %629 = vrot.lane.b32.xlu0 %v288, 88
        %v630 = vpop.permute.xlu0 %629
        %v631 = vsel %vm295, %v628, 0
        %v633 = vsel %vm295, %v630, 0
        %635 = vmatprep.subr.mxu0 0.0
        %636 = vmatpush1.xpose.msra.mxu0 %v633
        %637 = vmatprep.subr.mxu0 0.0
        %638 = vmatpush1.xpose.msra.mxu0 0.0
        %639 = vmatprep.subr.mxu0 0.0
        %640 = vmatpush1.xpose.msra.mxu0 0.0
        %641 = vmatprep.subr.mxu0 0.0
        %642 = vmatpush1.xpose.msra.mxu0 0.0
        %643 = vmatprep.subr.mxu0 0.0
        %644 = vmatpush1.xpose.msra.mxu0 0.0
        %645 = vmatprep.subr.mxu0 0.0
        %646 = vmatpush1.xpose.msra.mxu0 0.0
        %647 = vmatprep.subr.mxu0 0.0
        %648 = vmatpush1.xpose.msra.mxu0 0.0
        %649 = vmatprep.subr.mxu0 0.0
        %650 = vmatpush1.xpose.msra.mxu0 0.0
        %651 = vmatprep.subr.mxu0 0.0
        %652 = vmatpush1.xpose.msra.mxu0 0.0
        %653 = vmatprep.subr.mxu0 0.0
        %654 = vmatpush1.xpose.msra.mxu0 0.0
        %655 = vmatprep.subr.mxu0 0.0
        %656 = vmatpush1.xpose.msra.mxu0 0.0
        %657 = vmatprep.subr.mxu0 0.0
        %658 = vmatpush1.xpose.msra.mxu0 0.0
        %659 = vmatprep.subr.mxu0 0.0
        %660 = vmatpush1.xpose.msra.mxu0 0.0
        %661 = vmatprep.subr.mxu0 0.0
        %662 = vmatpush1.xpose.msra.mxu0 0.0
        %663 = vmatprep.subr.mxu0 0.0
        %664 = vmatpush1.xpose.msra.mxu0 0.0
        %665 = vmatprep.subr.mxu0 0.0
        %666 = vmatpush1.xpose.msra.mxu0 0.0
        %667 = vmatprep.subr.mxu0 0.0
        %668 = vmatpush1.xpose.msra.mxu0 0.0
        %669 = vmatprep.subr.mxu0 0.0
        %670 = vmatpush1.xpose.msra.mxu0 0.0
        %671 = vmatprep.subr.mxu0 0.0
        %672 = vmatpush1.xpose.msra.mxu0 0.0
        %673 = vmatprep.subr.mxu0 0.0
        %674 = vmatpush1.xpose.msra.mxu0 0.0
        %675 = vmatprep.subr.mxu0 0.0
        %676 = vmatpush1.xpose.msra.mxu0 0.0
        %677 = vmatprep.subr.mxu0 0.0
        %678 = vmatpush1.xpose.msra.mxu0 0.0
        %679 = vmatprep.subr.mxu0 0.0
        %680 = vmatpush1.xpose.msra.mxu0 0.0
        %681 = vmatprep.subr.mxu0 0.0
        %682 = vmatpush1.xpose.msra.mxu0 0.0
        %683 = vmatprep.subr.mxu0 0.0
        %684 = vmatpush1.xpose.msra.mxu0 0.0
        %685 = vmatprep.subr.mxu0 0.0
        %686 = vmatpush1.xpose.msra.mxu0 0.0
        %687 = vmatprep.subr.mxu0 0.0
        %688 = vmatpush1.xpose.msra.mxu0 0.0
        %689 = vmatprep.subr.mxu0 0.0
        %690 = vmatpush1.xpose.msra.mxu0 0.0
        %691 = vmatprep.subr.mxu0 0.0
        %692 = vmatpush1.xpose.msra.mxu0 0.0
        %693 = vmatprep.subr.mxu0 0.0
        %694 = vmatpush1.xpose.msra.mxu0 0.0
        %695 = vmatprep.subr.mxu0 0.0
        %696 = vmatpush1.xpose.msra.mxu0 0.0
        %697 = vmatprep.subr.mxu0 0.0
        %698 = vmatpush1.xpose.msra.mxu0 0.0
        %699 = vmatprep.mubr.f32.mxu0 0.0
        %700 = vmatmul.mubr.f32.gmra.mrb[0].mxu0 %v631
        %v701 = vpop.f32.mrb[0].mxu0
        %v702 = vadd.f32 0.0, %v701
        %v703 = vpop.f32.mrb[0].mxu0
        %704 = vdwg.mxu0
        %v705 = vsel %vm371, %v702, -inf
        %706 = vmax.xlane.f32.xlu0 %v705
        %v707 = vpop.xlane.xlu0 %706
        %v708 = vsub.f32 %v702, %v707
        %v709 = vmul.f32 %v708, 1.442695
        %v710 = vpow.pop %v709
        %v711 = vsel %vm371, %v710, 0.0
        %712 = vadd.xlane.f32.xlu0 %v711
        %v713 = vpop.xlane.xlu0 %712
        %v714 = vrcp.pop %v713
        %v715 = vmul.f32 %v710, %v714
        %s716 = scalar_lea.vmem %s211, 16 [#allocation8]
        %717 = vst.msk [vmem:[%s716] sm:$0xff] %vm371, %v715
        %718 = vrot.lane.b32.xlu0 %v288, 56
        %v719 = vpop.permute.xlu0 %718
        %v722 = vsel %vm371, %v715, 0
        %724 = vmatprep.subr.mxu0 0.0
        %725 = vmatpush1.msra.mxu0 %v719
        %726 = vmatprep.subr.mxu0 0.0
        %727 = vmatpush1.msra.mxu0 0.0
        %728 = vmatprep.subr.mxu0 0.0
        %729 = vmatpush1.msra.mxu0 0.0
        %730 = vmatprep.subr.mxu0 0.0
        %731 = vmatpush1.msra.mxu0 0.0
        %732 = vmatprep.subr.mxu0 0.0
        %733 = vmatpush1.msra.mxu0 0.0
        %734 = vmatprep.subr.mxu0 0.0
        %735 = vmatpush1.msra.mxu0 0.0
        %736 = vmatprep.subr.mxu0 0.0
        %737 = vmatpush1.msra.mxu0 0.0
        %738 = vmatprep.subr.mxu0 0.0
        %739 = vmatpush1.msra.mxu0 0.0
        %740 = vmatprep.subr.mxu0 0.0
        %741 = vmatpush1.msra.mxu0 0.0
        %742 = vmatprep.subr.mxu0 0.0
        %743 = vmatpush1.msra.mxu0 0.0
        %744 = vmatprep.subr.mxu0 0.0
        %745 = vmatpush1.msra.mxu0 0.0
        %746 = vmatprep.subr.mxu0 0.0
        %747 = vmatpush1.msra.mxu0 0.0
        %748 = vmatprep.subr.mxu0 0.0
        %749 = vmatpush1.msra.mxu0 0.0
        %750 = vmatprep.subr.mxu0 0.0
        %751 = vmatpush1.msra.mxu0 0.0
        %752 = vmatprep.subr.mxu0 0.0
        %753 = vmatpush1.msra.mxu0 0.0
        %754 = vmatprep.subr.mxu0 0.0
        %755 = vmatpush1.msra.mxu0 0.0
        %756 = vmatprep.subr.mxu0 0.0
        %757 = vmatpush1.msra.mxu0 0.0
        %758 = vmatprep.subr.mxu0 0.0
        %759 = vmatpush1.msra.mxu0 0.0
        %760 = vmatprep.subr.mxu0 0.0
        %761 = vmatpush1.msra.mxu0 0.0
        %762 = vmatprep.subr.mxu0 0.0
        %763 = vmatpush1.msra.mxu0 0.0
        %764 = vmatprep.subr.mxu0 0.0
        %765 = vmatpush1.msra.mxu0 0.0
        %766 = vmatprep.subr.mxu0 0.0
        %767 = vmatpush1.msra.mxu0 0.0
        %768 = vmatprep.subr.mxu0 0.0
        %769 = vmatpush1.msra.mxu0 0.0
        %770 = vmatprep.subr.mxu0 0.0
        %771 = vmatpush1.msra.mxu0 0.0
        %772 = vmatprep.subr.mxu0 0.0
        %773 = vmatpush1.msra.mxu0 0.0
        %774 = vmatprep.subr.mxu0 0.0
        %775 = vmatpush1.msra.mxu0 0.0
        %776 = vmatprep.subr.mxu0 0.0
        %777 = vmatpush1.msra.mxu0 0.0
        %778 = vmatprep.subr.mxu0 0.0
        %779 = vmatpush1.msra.mxu0 0.0
        %780 = vmatprep.subr.mxu0 0.0
        %781 = vmatpush1.msra.mxu0 0.0
        %782 = vmatprep.subr.mxu0 0.0
        %783 = vmatpush1.msra.mxu0 0.0
        %784 = vmatprep.subr.mxu0 0.0
        %785 = vmatpush1.msra.mxu0 0.0
        %786 = vmatprep.subr.mxu0 0.0
        %787 = vmatpush1.msra.mxu0 0.0
        %788 = vmatprep.mubr.f32.mxu0 0.0
        %789 = vmatmul.mubr.f32.gmra.mrb[0].mxu0 %v722
        %v790 = vpop.f32.mrb[0].mxu0
        %v791 = vadd.f32 0.0, %v790
        %v792 = vpop.f32.mrb[0].mxu0
        %793 = vdwg.mxu0
        %794 = vrot.lane.b32.xlu0 %v291, 116
        %v795 = vpop.permute.xlu0 %794
        %796 = vrot.lane.b32.xlu0 %v288, 84
        %v797 = vpop.permute.xlu0 %796
        %v798 = vsel %vm295, %v795, 0
        %v800 = vsel %vm295, %v797, 0
        %802 = vmatprep.subr.mxu0 0.0
        %803 = vmatpush1.xpose.msra.mxu0 %v800
        %804 = vmatprep.subr.mxu0 0.0
        %805 = vmatpush1.xpose.msra.mxu0 0.0
        %806 = vmatprep.subr.mxu0 0.0
        %807 = vmatpush1.xpose.msra.mxu0 0.0
        %808 = vmatprep.subr.mxu0 0.0
        %809 = vmatpush1.xpose.msra.mxu0 0.0
        %810 = vmatprep.subr.mxu0 0.0
        %811 = vmatpush1.xpose.msra.mxu0 0.0
        %812 = vmatprep.subr.mxu0 0.0
        %813 = vmatpush1.xpose.msra.mxu0 0.0
        %814 = vmatprep.subr.mxu0 0.0
        %815 = vmatpush1.xpose.msra.mxu0 0.0
        %816 = vmatprep.subr.mxu0 0.0
        %817 = vmatpush1.xpose.msra.mxu0 0.0
        %818 = vmatprep.subr.mxu0 0.0
        %819 = vmatpush1.xpose.msra.mxu0 0.0
        %820 = vmatprep.subr.mxu0 0.0
        %821 = vmatpush1.xpose.msra.mxu0 0.0
        %822 = vmatprep.subr.mxu0 0.0
        %823 = vmatpush1.xpose.msra.mxu0 0.0
        %824 = vmatprep.subr.mxu0 0.0
        %825 = vmatpush1.xpose.msra.mxu0 0.0
        %826 = vmatprep.subr.mxu0 0.0
        %827 = vmatpush1.xpose.msra.mxu0 0.0
        %828 = vmatprep.subr.mxu0 0.0
        %829 = vmatpush1.xpose.msra.mxu0 0.0
        %830 = vmatprep.subr.mxu0 0.0
        %831 = vmatpush1.xpose.msra.mxu0 0.0
        %832 = vmatprep.subr.mxu0 0.0
        %833 = vmatpush1.xpose.msra.mxu0 0.0
        %834 = vmatprep.subr.mxu0 0.0
        %835 = vmatpush1.xpose.msra.mxu0 0.0
        %836 = vmatprep.subr.mxu0 0.0
        %837 = vmatpush1.xpose.msra.mxu0 0.0
        %838 = vmatprep.subr.mxu0 0.0
        %839 = vmatpush1.xpose.msra.mxu0 0.0
        %840 = vmatprep.subr.mxu0 0.0
        %841 = vmatpush1.xpose.msra.mxu0 0.0
        %842 = vmatprep.subr.mxu0 0.0
        %843 = vmatpush1.xpose.msra.mxu0 0.0
        %844 = vmatprep.subr.mxu0 0.0
        %845 = vmatpush1.xpose.msra.mxu0 0.0
        %846 = vmatprep.subr.mxu0 0.0
        %847 = vmatpush1.xpose.msra.mxu0 0.0
        %848 = vmatprep.subr.mxu0 0.0
        %849 = vmatpush1.xpose.msra.mxu0 0.0
        %850 = vmatprep.subr.mxu0 0.0
        %851 = vmatpush1.xpose.msra.mxu0 0.0
        %852 = vmatprep.subr.mxu0 0.0
        %853 = vmatpush1.xpose.msra.mxu0 0.0
        %854 = vmatprep.subr.mxu0 0.0
        %855 = vmatpush1.xpose.msra.mxu0 0.0
        %856 = vmatprep.subr.mxu0 0.0
        %857 = vmatpush1.xpose.msra.mxu0 0.0
        %858 = vmatprep.subr.mxu0 0.0
        %859 = vmatpush1.xpose.msra.mxu0 0.0
        %860 = vmatprep.subr.mxu0 0.0
        %861 = vmatpush1.xpose.msra.mxu0 0.0
        %862 = vmatprep.subr.mxu0 0.0
        %863 = vmatpush1.xpose.msra.mxu0 0.0
        %864 = vmatprep.subr.mxu0 0.0
        %865 = vmatpush1.xpose.msra.mxu0 0.0
        %866 = vmatprep.mubr.f32.mxu0 0.0
        %867 = vmatmul.mubr.f32.gmra.mrb[0].mxu0 %v798
        %v868 = vpop.f32.mrb[0].mxu0
        %v869 = vadd.f32 0.0, %v868
        %v870 = vpop.f32.mrb[0].mxu0
        %871 = vdwg.mxu0
        %v872 = vsel %vm371, %v869, -inf
        %873 = vmax.xlane.f32.xlu0 %v872
        %v874 = vpop.xlane.xlu0 %873
        %v875 = vsub.f32 %v869, %v874
        %v876 = vmul.f32 %v875, 1.442695
        %v877 = vpow.pop %v876
        %v878 = vsel %vm371, %v877, 0.0
        %879 = vadd.xlane.f32.xlu0 %v878
        %v880 = vpop.xlane.xlu0 %879
        %v881 = vrcp.pop %v880
        %v882 = vmul.f32 %v877, %v881
        %s883 = scalar_lea.vmem %s211, 24 [#allocation8]
        %884 = vst.msk [vmem:[%s883] sm:$0xff] %vm371, %v882
        %885 = vrot.lane.b32.xlu0 %v288, 52
        %v886 = vpop.permute.xlu0 %885
        %v889 = vsel %vm371, %v882, 0
        %891 = vmatprep.subr.mxu0 0.0
        %892 = vmatpush1.msra.mxu0 %v886
        %893 = vmatprep.subr.mxu0 0.0
        %894 = vmatpush1.msra.mxu0 0.0
        %895 = vmatprep.subr.mxu0 0.0
        %896 = vmatpush1.msra.mxu0 0.0
        %897 = vmatprep.subr.mxu0 0.0
        %898 = vmatpush1.msra.mxu0 0.0
        %899 = vmatprep.subr.mxu0 0.0
        %900 = vmatpush1.msra.mxu0 0.0
        %901 = vmatprep.subr.mxu0 0.0
        %902 = vmatpush1.msra.mxu0 0.0
        %903 = vmatprep.subr.mxu0 0.0
        %904 = vmatpush1.msra.mxu0 0.0
        %905 = vmatprep.subr.mxu0 0.0
        %906 = vmatpush1.msra.mxu0 0.0
        %907 = vmatprep.subr.mxu0 0.0
        %908 = vmatpush1.msra.mxu0 0.0
        %909 = vmatprep.subr.mxu0 0.0
        %910 = vmatpush1.msra.mxu0 0.0
        %911 = vmatprep.subr.mxu0 0.0
        %912 = vmatpush1.msra.mxu0 0.0
        %913 = vmatprep.subr.mxu0 0.0
        %914 = vmatpush1.msra.mxu0 0.0
        %915 = vmatprep.subr.mxu0 0.0
        %916 = vmatpush1.msra.mxu0 0.0
        %917 = vmatprep.subr.mxu0 0.0
        %918 = vmatpush1.msra.mxu0 0.0
        %919 = vmatprep.subr.mxu0 0.0
        %920 = vmatpush1.msra.mxu0 0.0
        %921 = vmatprep.subr.mxu0 0.0
        %922 = vmatpush1.msra.mxu0 0.0
        %923 = vmatprep.subr.mxu0 0.0
        %924 = vmatpush1.msra.mxu0 0.0
        %925 = vmatprep.subr.mxu0 0.0
        %926 = vmatpush1.msra.mxu0 0.0
        %927 = vmatprep.subr.mxu0 0.0
        %928 = vmatpush1.msra.mxu0 0.0
        %929 = vmatprep.subr.mxu0 0.0
        %930 = vmatpush1.msra.mxu0 0.0
        %931 = vmatprep.subr.mxu0 0.0
        %932 = vmatpush1.msra.mxu0 0.0
        %933 = vmatprep.subr.mxu0 0.0
        %934 = vmatpush1.msra.mxu0 0.0
        %935 = vmatprep.subr.mxu0 0.0
        %936 = vmatpush1.msra.mxu0 0.0
        %937 = vmatprep.subr.mxu0 0.0
        %938 = vmatpush1.msra.mxu0 0.0
        %939 = vmatprep.subr.mxu0 0.0
        %940 = vmatpush1.msra.mxu0 0.0
        %941 = vmatprep.subr.mxu0 0.0
        %942 = vmatpush1.msra.mxu0 0.0
        %943 = vmatprep.subr.mxu0 0.0
        %944 = vmatpush1.msra.mxu0 0.0
        %945 = vmatprep.subr.mxu0 0.0
        %946 = vmatpush1.msra.mxu0 0.0
        %947 = vmatprep.subr.mxu0 0.0
        %948 = vmatpush1.msra.mxu0 0.0
        %949 = vmatprep.subr.mxu0 0.0
        %950 = vmatpush1.msra.mxu0 0.0
        %951 = vmatprep.subr.mxu0 0.0
        %952 = vmatpush1.msra.mxu0 0.0
        %953 = vmatprep.subr.mxu0 0.0
        %954 = vmatpush1.msra.mxu0 0.0
        %955 = vmatprep.mubr.f32.mxu0 0.0
        %956 = vmatmul.mubr.f32.gmra.mrb[0].mxu0 %v889
        %v957 = vpop.f32.mrb[0].mxu0
        %v958 = vadd.f32 0.0, %v957
        %v959 = vpop.f32.mrb[0].mxu0
        %960 = vdwg.mxu0
        %961 = vrot.lane.b32.xlu0 %v291, 112
        %v962 = vpop.permute.xlu0 %961
        %963 = vrot.lane.b32.xlu0 %v288, 80
        %v964 = vpop.permute.xlu0 %963
        %v965 = vsel %vm295, %v962, 0
        %v967 = vsel %vm295, %v964, 0
        %969 = vmatprep.subr.mxu0 0.0
        %970 = vmatpush1.xpose.msra.mxu0 %v967
        %971 = vmatprep.subr.mxu0 0.0
        %972 = vmatpush1.xpose.msra.mxu0 0.0
        %973 = vmatprep.subr.mxu0 0.0
        %974 = vmatpush1.xpose.msra.mxu0 0.0
        %975 = vmatprep.subr.mxu0 0.0
        %976 = vmatpush1.xpose.msra.mxu0 0.0
        %977 = vmatprep.subr.mxu0 0.0
        %978 = vmatpush1.xpose.msra.mxu0 0.0
        %979 = vmatprep.subr.mxu0 0.0
        %980 = vmatpush1.xpose.msra.mxu0 0.0
        %981 = vmatprep.subr.mxu0 0.0
        %982 = vmatpush1.xpose.msra.mxu0 0.0
        %983 = vmatprep.subr.mxu0 0.0
        %984 = vmatpush1.xpose.msra.mxu0 0.0
        %985 = vmatprep.subr.mxu0 0.0
        %986 = vmatpush1.xpose.msra.mxu0 0.0
        %987 = vmatprep.subr.mxu0 0.0
        %988 = vmatpush1.xpose.msra.mxu0 0.0
        %989 = vmatprep.subr.mxu0 0.0
        %990 = vmatpush1.xpose.msra.mxu0 0.0
        %991 = vmatprep.subr.mxu0 0.0
        %992 = vmatpush1.xpose.msra.mxu0 0.0
        %993 = vmatprep.subr.mxu0 0.0
        %994 = vmatpush1.xpose.msra.mxu0 0.0
        %995 = vmatprep.subr.mxu0 0.0
        %996 = vmatpush1.xpose.msra.mxu0 0.0
        %997 = vmatprep.subr.mxu0 0.0
        %998 = vmatpush1.xpose.msra.mxu0 0.0
        %999 = vmatprep.subr.mxu0 0.0
        %1000 = vmatpush1.xpose.msra.mxu0 0.0
        %1001 = vmatprep.subr.mxu0 0.0
        %1002 = vmatpush1.xpose.msra.mxu0 0.0
        %1003 = vmatprep.subr.mxu0 0.0
        %1004 = vmatpush1.xpose.msra.mxu0 0.0
        %1005 = vmatprep.subr.mxu0 0.0
        %1006 = vmatpush1.xpose.msra.mxu0 0.0
        %1007 = vmatprep.subr.mxu0 0.0
        %1008 = vmatpush1.xpose.msra.mxu0 0.0
        %1009 = vmatprep.subr.mxu0 0.0
        %1010 = vmatpush1.xpose.msra.mxu0 0.0
        %1011 = vmatprep.subr.mxu0 0.0
        %1012 = vmatpush1.xpose.msra.mxu0 0.0
        %1013 = vmatprep.subr.mxu0 0.0
        %1014 = vmatpush1.xpose.msra.mxu0 0.0
        %1015 = vmatprep.subr.mxu0 0.0
        %1016 = vmatpush1.xpose.msra.mxu0 0.0
        %1017 = vmatprep.subr.mxu0 0.0
        %1018 = vmatpush1.xpose.msra.mxu0 0.0
        %1019 = vmatprep.subr.mxu0 0.0
        %1020 = vmatpush1.xpose.msra.mxu0 0.0
        %1021 = vmatprep.subr.mxu0 0.0
        %1022 = vmatpush1.xpose.msra.mxu0 0.0
        %1023 = vmatprep.subr.mxu0 0.0
        %1024 = vmatpush1.xpose.msra.mxu0 0.0
        %1025 = vmatprep.subr.mxu0 0.0
        %1026 = vmatpush1.xpose.msra.mxu0 0.0
        %1027 = vmatprep.subr.mxu0 0.0
        %1028 = vmatpush1.xpose.msra.mxu0 0.0
        %1029 = vmatprep.subr.mxu0 0.0
        %1030 = vmatpush1.xpose.msra.mxu0 0.0
        %1031 = vmatprep.subr.mxu0 0.0
        %1032 = vmatpush1.xpose.msra.mxu0 0.0
        %1033 = vmatprep.mubr.f32.mxu0 0.0
        %1034 = vmatmul.mubr.f32.gmra.mrb[0].mxu0 %v965
        %v1035 = vpop.f32.mrb[0].mxu0
        %v1036 = vadd.f32 0.0, %v1035
        %v1037 = vpop.f32.mrb[0].mxu0
        %1038 = vdwg.mxu0
        %v1039 = vsel %vm371, %v1036, -inf
        %1040 = vmax.xlane.f32.xlu0 %v1039
        %v1041 = vpop.xlane.xlu0 %1040
        %v1042 = vsub.f32 %v1036, %v1041
        %v1043 = vmul.f32 %v1042, 1.442695
        %v1044 = vpow.pop %v1043
        %v1045 = vsel %vm371, %v1044, 0.0
        %1046 = vadd.xlane.f32.xlu0 %v1045
        %v1047 = vpop.xlane.xlu0 %1046
        %v1048 = vrcp.pop %v1047
        %v1049 = vmul.f32 %v1044, %v1048
        %s1050 = scalar_lea.vmem %s211, 32 [#allocation8]
        %1051 = vst.msk [vmem:[%s1050] sm:$0xff] %vm371, %v1049
        %1052 = vrot.lane.b32.xlu0 %v288, 48
        %v1053 = vpop.permute.xlu0 %1052
        %v1056 = vsel %vm371, %v1049, 0
        %1058 = vmatprep.subr.mxu0 0.0
        %1059 = vmatpush1.msra.mxu0 %v1053
        %1060 = vmatprep.subr.mxu0 0.0
        %1061 = vmatpush1.msra.mxu0 0.0
        %1062 = vmatprep.subr.mxu0 0.0
        %1063 = vmatpush1.msra.mxu0 0.0
        %1064 = vmatprep.subr.mxu0 0.0
        %1065 = vmatpush1.msra.mxu0 0.0
        %1066 = vmatprep.subr.mxu0 0.0
        %1067 = vmatpush1.msra.mxu0 0.0
        %1068 = vmatprep.subr.mxu0 0.0
        %1069 = vmatpush1.msra.mxu0 0.0
        %1070 = vmatprep.subr.mxu0 0.0
        %1071 = vmatpush1.msra.mxu0 0.0
        %1072 = vmatprep.subr.mxu0 0.0
        %1073 = vmatpush1.msra.mxu0 0.0
        %1074 = vmatprep.subr.mxu0 0.0
        %1075 = vmatpush1.msra.mxu0 0.0
        %1076 = vmatprep.subr.mxu0 0.0
        %1077 = vmatpush1.msra.mxu0 0.0
        %1078 = vmatprep.subr.mxu0 0.0
        %1079 = vmatpush1.msra.mxu0 0.0
        %1080 = vmatprep.subr.mxu0 0.0
        %1081 = vmatpush1.msra.mxu0 0.0
        %1082 = vmatprep.subr.mxu0 0.0
        %1083 = vmatpush1.msra.mxu0 0.0
        %1084 = vmatprep.subr.mxu0 0.0
        %1085 = vmatpush1.msra.mxu0 0.0
        %1086 = vmatprep.subr.mxu0 0.0
        %1087 = vmatpush1.msra.mxu0 0.0
        %1088 = vmatprep.subr.mxu0 0.0
        %1089 = vmatpush1.msra.mxu0 0.0
        %1090 = vmatprep.subr.mxu0 0.0
        %1091 = vmatpush1.msra.mxu0 0.0
        %1092 = vmatprep.subr.mxu0 0.0
        %1093 = vmatpush1.msra.mxu0 0.0
        %1094 = vmatprep.subr.mxu0 0.0
        %1095 = vmatpush1.msra.mxu0 0.0
        %1096 = vmatprep.subr.mxu0 0.0
        %1097 = vmatpush1.msra.mxu0 0.0
        %1098 = vmatprep.subr.mxu0 0.0
        %1099 = vmatpush1.msra.mxu0 0.0
        %1100 = vmatprep.subr.mxu0 0.0
        %1101 = vmatpush1.msra.mxu0 0.0
        %1102 = vmatprep.subr.mxu0 0.0
        %1103 = vmatpush1.msra.mxu0 0.0
        %1104 = vmatprep.subr.mxu0 0.0
        %1105 = vmatpush1.msra.mxu0 0.0
        %1106 = vmatprep.subr.mxu0 0.0
        %1107 = vmatpush1.msra.mxu0 0.0
        %1108 = vmatprep.subr.mxu0 0.0
        %1109 = vmatpush1.msra.mxu0 0.0
        %1110 = vmatprep.subr.mxu0 0.0
        %1111 = vmatpush1.msra.mxu0 0.0
        %1112 = vmatprep.subr.mxu0 0.0
        %1113 = vmatpush1.msra.mxu0 0.0
        %1114 = vmatprep.subr.mxu0 0.0
        %1115 = vmatpush1.msra.mxu0 0.0
        %1116 = vmatprep.subr.mxu0 0.0
        %1117 = vmatpush1.msra.mxu0 0.0
        %1118 = vmatprep.subr.mxu0 0.0
        %1119 = vmatpush1.msra.mxu0 0.0
        %1120 = vmatprep.subr.mxu0 0.0
        %1121 = vmatpush1.msra.mxu0 0.0
        %1122 = vmatprep.mubr.f32.mxu0 0.0
        %1123 = vmatmul.mubr.f32.gmra.mrb[0].mxu0 %v1056
        %v1124 = vpop.f32.mrb[0].mxu0
        %v1125 = vadd.f32 0.0, %v1124
        %v1126 = vpop.f32.mrb[0].mxu0
        %1127 = vdwg.mxu0
        %1128 = vrot.lane.b32.xlu0 %v291, 108
        %v1129 = vpop.permute.xlu0 %1128
        %1130 = vrot.lane.b32.xlu0 %v288, 76
        %v1131 = vpop.permute.xlu0 %1130
        %v1132 = vsel %vm295, %v1129, 0
        %v1134 = vsel %vm295, %v1131, 0
        %1136 = vmatprep.subr.mxu0 0.0
        %1137 = vmatpush1.xpose.msra.mxu0 %v1134
        %1138 = vmatprep.subr.mxu0 0.0
        %1139 = vmatpush1.xpose.msra.mxu0 0.0
        %1140 = vmatprep.subr.mxu0 0.0
        %1141 = vmatpush1.xpose.msra.mxu0 0.0
        %1142 = vmatprep.subr.mxu0 0.0
        %1143 = vmatpush1.xpose.msra.mxu0 0.0
        %1144 = vmatprep.subr.mxu0 0.0
        %1145 = vmatpush1.xpose.msra.mxu0 0.0
        %1146 = vmatprep.subr.mxu0 0.0
        %1147 = vmatpush1.xpose.msra.mxu0 0.0
        %1148 = vmatprep.subr.mxu0 0.0
        %1149 = vmatpush1.xpose.msra.mxu0 0.0
        %1150 = vmatprep.subr.mxu0 0.0
        %1151 = vmatpush1.xpose.msra.mxu0 0.0
        %1152 = vmatprep.subr.mxu0 0.0
        %1153 = vmatpush1.xpose.msra.mxu0 0.0
        %1154 = vmatprep.subr.mxu0 0.0
        %1155 = vmatpush1.xpose.msra.mxu0 0.0
        %1156 = vmatprep.subr.mxu0 0.0
        %1157 = vmatpush1.xpose.msra.mxu0 0.0
        %1158 = vmatprep.subr.mxu0 0.0
        %1159 = vmatpush1.xpose.msra.mxu0 0.0
        %1160 = vmatprep.subr.mxu0 0.0
        %1161 = vmatpush1.xpose.msra.mxu0 0.0
        %1162 = vmatprep.subr.mxu0 0.0
        %1163 = vmatpush1.xpose.msra.mxu0 0.0
        %1164 = vmatprep.subr.mxu0 0.0
        %1165 = vmatpush1.xpose.msra.mxu0 0.0
        %1166 = vmatprep.subr.mxu0 0.0
        %1167 = vmatpush1.xpose.msra.mxu0 0.0
        %1168 = vmatprep.subr.mxu0 0.0
        %1169 = vmatpush1.xpose.msra.mxu0 0.0
        %1170 = vmatprep.subr.mxu0 0.0
        %1171 = vmatpush1.xpose.msra.mxu0 0.0
        %1172 = vmatprep.subr.mxu0 0.0
        %1173 = vmatpush1.xpose.msra.mxu0 0.0
        %1174 = vmatprep.subr.mxu0 0.0
        %1175 = vmatpush1.xpose.msra.mxu0 0.0
        %1176 = vmatprep.subr.mxu0 0.0
        %1177 = vmatpush1.xpose.msra.mxu0 0.0
        %1178 = vmatprep.subr.mxu0 0.0
        %1179 = vmatpush1.xpose.msra.mxu0 0.0
        %1180 = vmatprep.subr.mxu0 0.0
        %1181 = vmatpush1.xpose.msra.mxu0 0.0
        %1182 = vmatprep.subr.mxu0 0.0
        %1183 = vmatpush1.xpose.msra.mxu0 0.0
        %1184 = vmatprep.subr.mxu0 0.0
        %1185 = vmatpush1.xpose.msra.mxu0 0.0
        %1186 = vmatprep.subr.mxu0 0.0
        %1187 = vmatpush1.xpose.msra.mxu0 0.0
        %1188 = vmatprep.subr.mxu0 0.0
        %1189 = vmatpush1.xpose.msra.mxu0 0.0
        %1190 = vmatprep.subr.mxu0 0.0
        %1191 = vmatpush1.xpose.msra.mxu0 0.0
        %1192 = vmatprep.subr.mxu0 0.0
        %1193 = vmatpush1.xpose.msra.mxu0 0.0
        %1194 = vmatprep.subr.mxu0 0.0
        %1195 = vmatpush1.xpose.msra.mxu0 0.0
        %1196 = vmatprep.subr.mxu0 0.0
        %1197 = vmatpush1.xpose.msra.mxu0 0.0
        %1198 = vmatprep.subr.mxu0 0.0
        %1199 = vmatpush1.xpose.msra.mxu0 0.0
        %1200 = vmatprep.mubr.f32.mxu0 0.0
        %1201 = vmatmul.mubr.f32.gmra.mrb[0].mxu0 %v1132
        %v1202 = vpop.f32.mrb[0].mxu0
        %v1203 = vadd.f32 0.0, %v1202
        %v1204 = vpop.f32.mrb[0].mxu0
        %1205 = vdwg.mxu0
        %v1206 = vsel %vm371, %v1203, -inf
        %1207 = vmax.xlane.f32.xlu0 %v1206
        %v1208 = vpop.xlane.xlu0 %1207
        %v1209 = vsub.f32 %v1203, %v1208
        %v1210 = vmul.f32 %v1209, 1.442695
        %v1211 = vpow.pop %v1210
        %v1212 = vsel %vm371, %v1211, 0.0
        %1213 = vadd.xlane.f32.xlu0 %v1212
        %v1214 = vpop.xlane.xlu0 %1213
        %v1215 = vrcp.pop %v1214
        %v1216 = vmul.f32 %v1211, %v1215
        %s1217 = scalar_lea.vmem %s211, 40 [#allocation8]
        %1218 = vst.msk [vmem:[%s1217] sm:$0xff] %vm371, %v1216
        %1219 = vrot.lane.b32.xlu0 %v288, 44
        %v1220 = vpop.permute.xlu0 %1219
        %v1223 = vsel %vm371, %v1216, 0
        %1225 = vmatprep.subr.mxu0 0.0
        %1226 = vmatpush1.msra.mxu0 %v1220
        %1227 = vmatprep.subr.mxu0 0.0
        %1228 = vmatpush1.msra.mxu0 0.0
        %1229 = vmatprep.subr.mxu0 0.0
        %1230 = vmatpush1.msra.mxu0 0.0
        %1231 = vmatprep.subr.mxu0 0.0
        %1232 = vmatpush1.msra.mxu0 0.0
        %1233 = vmatprep.subr.mxu0 0.0
        %1234 = vmatpush1.msra.mxu0 0.0
        %1235 = vmatprep.subr.mxu0 0.0
        %1236 = vmatpush1.msra.mxu0 0.0
        %1237 = vmatprep.subr.mxu0 0.0
        %1238 = vmatpush1.msra.mxu0 0.0
        %1239 = vmatprep.subr.mxu0 0.0
        %1240 = vmatpush1.msra.mxu0 0.0
        %1241 = vmatprep.subr.mxu0 0.0
        %1242 = vmatpush1.msra.mxu0 0.0
        %1243 = vmatprep.subr.mxu0 0.0
        %1244 = vmatpush1.msra.mxu0 0.0
        %1245 = vmatprep.subr.mxu0 0.0
        %1246 = vmatpush1.msra.mxu0 0.0
        %1247 = vmatprep.subr.mxu0 0.0
        %1248 = vmatpush1.msra.mxu0 0.0
        %1249 = vmatprep.subr.mxu0 0.0
        %1250 = vmatpush1.msra.mxu0 0.0
        %1251 = vmatprep.subr.mxu0 0.0
        %1252 = vmatpush1.msra.mxu0 0.0
        %1253 = vmatprep.subr.mxu0 0.0
        %1254 = vmatpush1.msra.mxu0 0.0
        %1255 = vmatprep.subr.mxu0 0.0
        %1256 = vmatpush1.msra.mxu0 0.0
        %1257 = vmatprep.subr.mxu0 0.0
        %1258 = vmatpush1.msra.mxu0 0.0
        %1259 = vmatprep.subr.mxu0 0.0
        %1260 = vmatpush1.msra.mxu0 0.0
        %1261 = vmatprep.subr.mxu0 0.0
        %1262 = vmatpush1.msra.mxu0 0.0
        %1263 = vmatprep.subr.mxu0 0.0
        %1264 = vmatpush1.msra.mxu0 0.0
        %1265 = vmatprep.subr.mxu0 0.0
        %1266 = vmatpush1.msra.mxu0 0.0
        %1267 = vmatprep.subr.mxu0 0.0
        %1268 = vmatpush1.msra.mxu0 0.0
        %1269 = vmatprep.subr.mxu0 0.0
        %1270 = vmatpush1.msra.mxu0 0.0
        %1271 = vmatprep.subr.mxu0 0.0
        %1272 = vmatpush1.msra.mxu0 0.0
        %1273 = vmatprep.subr.mxu0 0.0
        %1274 = vmatpush1.msra.mxu0 0.0
        %1275 = vmatprep.subr.mxu0 0.0
        %1276 = vmatpush1.msra.mxu0 0.0
        %1277 = vmatprep.subr.mxu0 0.0
        %1278 = vmatpush1.msra.mxu0 0.0
        %1279 = vmatprep.subr.mxu0 0.0
        %1280 = vmatpush1.msra.mxu0 0.0
        %1281 = vmatprep.subr.mxu0 0.0
        %1282 = vmatpush1.msra.mxu0 0.0
        %1283 = vmatprep.subr.mxu0 0.0
        %1284 = vmatpush1.msra.mxu0 0.0
        %1285 = vmatprep.subr.mxu0 0.0
        %1286 = vmatpush1.msra.mxu0 0.0
        %1287 = vmatprep.subr.mxu0 0.0
        %1288 = vmatpush1.msra.mxu0 0.0
        %1289 = vmatprep.mubr.f32.mxu0 0.0
        %1290 = vmatmul.mubr.f32.gmra.mrb[0].mxu0 %v1223
        %v1291 = vpop.f32.mrb[0].mxu0
        %v1292 = vadd.f32 0.0, %v1291
        %v1293 = vpop.f32.mrb[0].mxu0
        %1294 = vdwg.mxu0
        %1295 = vrot.lane.b32.xlu0 %v291, 104
        %v1296 = vpop.permute.xlu0 %1295
        %1297 = vrot.lane.b32.xlu0 %v288, 72
        %v1298 = vpop.permute.xlu0 %1297
        %v1299 = vsel %vm295, %v1296, 0
        %v1301 = vsel %vm295, %v1298, 0
        %1303 = vmatprep.subr.mxu0 0.0
        %1304 = vmatpush1.xpose.msra.mxu0 %v1301
        %1305 = vmatprep.subr.mxu0 0.0
        %1306 = vmatpush1.xpose.msra.mxu0 0.0
        %1307 = vmatprep.subr.mxu0 0.0
        %1308 = vmatpush1.xpose.msra.mxu0 0.0
        %1309 = vmatprep.subr.mxu0 0.0
        %1310 = vmatpush1.xpose.msra.mxu0 0.0
        %1311 = vmatprep.subr.mxu0 0.0
        %1312 = vmatpush1.xpose.msra.mxu0 0.0
        %1313 = vmatprep.subr.mxu0 0.0
        %1314 = vmatpush1.xpose.msra.mxu0 0.0
        %1315 = vmatprep.subr.mxu0 0.0
        %1316 = vmatpush1.xpose.msra.mxu0 0.0
        %1317 = vmatprep.subr.mxu0 0.0
        %1318 = vmatpush1.xpose.msra.mxu0 0.0
        %1319 = vmatprep.subr.mxu0 0.0
        %1320 = vmatpush1.xpose.msra.mxu0 0.0
        %1321 = vmatprep.subr.mxu0 0.0
        %1322 = vmatpush1.xpose.msra.mxu0 0.0
        %1323 = vmatprep.subr.mxu0 0.0
        %1324 = vmatpush1.xpose.msra.mxu0 0.0
        %1325 = vmatprep.subr.mxu0 0.0
        %1326 = vmatpush1.xpose.msra.mxu0 0.0
        %1327 = vmatprep.subr.mxu0 0.0
        %1328 = vmatpush1.xpose.msra.mxu0 0.0
        %1329 = vmatprep.subr.mxu0 0.0
        %1330 = vmatpush1.xpose.msra.mxu0 0.0
        %1331 = vmatprep.subr.mxu0 0.0
        %1332 = vmatpush1.xpose.msra.mxu0 0.0
        %1333 = vmatprep.subr.mxu0 0.0
        %1334 = vmatpush1.xpose.msra.mxu0 0.0
        %1335 = vmatprep.subr.mxu0 0.0
        %1336 = vmatpush1.xpose.msra.mxu0 0.0
        %1337 = vmatprep.subr.mxu0 0.0
        %1338 = vmatpush1.xpose.msra.mxu0 0.0
        %1339 = vmatprep.subr.mxu0 0.0
        %1340 = vmatpush1.xpose.msra.mxu0 0.0
        %1341 = vmatprep.subr.mxu0 0.0
        %1342 = vmatpush1.xpose.msra.mxu0 0.0
        %1343 = vmatprep.subr.mxu0 0.0
        %1344 = vmatpush1.xpose.msra.mxu0 0.0
        %1345 = vmatprep.subr.mxu0 0.0
        %1346 = vmatpush1.xpose.msra.mxu0 0.0
        %1347 = vmatprep.subr.mxu0 0.0
        %1348 = vmatpush1.xpose.msra.mxu0 0.0
        %1349 = vmatprep.subr.mxu0 0.0
        %1350 = vmatpush1.xpose.msra.mxu0 0.0
        %1351 = vmatprep.subr.mxu0 0.0
        %1352 = vmatpush1.xpose.msra.mxu0 0.0
        %1353 = vmatprep.subr.mxu0 0.0
        %1354 = vmatpush1.xpose.msra.mxu0 0.0
        %1355 = vmatprep.subr.mxu0 0.0
        %1356 = vmatpush1.xpose.msra.mxu0 0.0
        %1357 = vmatprep.subr.mxu0 0.0
        %1358 = vmatpush1.xpose.msra.mxu0 0.0
        %1359 = vmatprep.subr.mxu0 0.0
        %1360 = vmatpush1.xpose.msra.mxu0 0.0
        %1361 = vmatprep.subr.mxu0 0.0
        %1362 = vmatpush1.xpose.msra.mxu0 0.0
        %1363 = vmatprep.subr.mxu0 0.0
        %1364 = vmatpush1.xpose.msra.mxu0 0.0
        %1365 = vmatprep.subr.mxu0 0.0
        %1366 = vmatpush1.xpose.msra.mxu0 0.0
        %1367 = vmatprep.mubr.f32.mxu0 0.0
        %1368 = vmatmul.mubr.f32.gmra.mrb[0].mxu0 %v1299
        %v1369 = vpop.f32.mrb[0].mxu0
        %v1370 = vadd.f32 0.0, %v1369
        %v1371 = vpop.f32.mrb[0].mxu0
        %1372 = vdwg.mxu0
        %v1373 = vsel %vm371, %v1370, -inf
        %1374 = vmax.xlane.f32.xlu0 %v1373
        %v1375 = vpop.xlane.xlu0 %1374
        %v1376 = vsub.f32 %v1370, %v1375
        %v1377 = vmul.f32 %v1376, 1.442695
        %v1378 = vpow.pop %v1377
        %v1379 = vsel %vm371, %v1378, 0.0
        %1380 = vadd.xlane.f32.xlu0 %v1379
        %v1381 = vpop.xlane.xlu0 %1380
        %v1382 = vrcp.pop %v1381
        %v1383 = vmul.f32 %v1378, %v1382
        %s1384 = scalar_lea.vmem %s211, 48 [#allocation8]
        %1385 = vst.msk [vmem:[%s1384] sm:$0xff] %vm371, %v1383
        %1386 = vrot.lane.b32.xlu0 %v288, 40
        %v1387 = vpop.permute.xlu0 %1386
        %v1390 = vsel %vm371, %v1383, 0
        %1392 = vmatprep.subr.mxu0 0.0
        %1393 = vmatpush1.msra.mxu0 %v1387
        %1394 = vmatprep.subr.mxu0 0.0
        %1395 = vmatpush1.msra.mxu0 0.0
        %1396 = vmatprep.subr.mxu0 0.0
        %1397 = vmatpush1.msra.mxu0 0.0
        %1398 = vmatprep.subr.mxu0 0.0
        %1399 = vmatpush1.msra.mxu0 0.0
        %1400 = vmatprep.subr.mxu0 0.0
        %1401 = vmatpush1.msra.mxu0 0.0
        %1402 = vmatprep.subr.mxu0 0.0
        %1403 = vmatpush1.msra.mxu0 0.0
        %1404 = vmatprep.subr.mxu0 0.0
        %1405 = vmatpush1.msra.mxu0 0.0
        %1406 = vmatprep.subr.mxu0 0.0
        %1407 = vmatpush1.msra.mxu0 0.0
        %1408 = vmatprep.subr.mxu0 0.0
        %1409 = vmatpush1.msra.mxu0 0.0
        %1410 = vmatprep.subr.mxu0 0.0
        %1411 = vmatpush1.msra.mxu0 0.0
        %1412 = vmatprep.subr.mxu0 0.0
        %1413 = vmatpush1.msra.mxu0 0.0
        %1414 = vmatprep.subr.mxu0 0.0
        %1415 = vmatpush1.msra.mxu0 0.0
        %1416 = vmatprep.subr.mxu0 0.0
        %1417 = vmatpush1.msra.mxu0 0.0
        %1418 = vmatprep.subr.mxu0 0.0
        %1419 = vmatpush1.msra.mxu0 0.0
        %1420 = vmatprep.subr.mxu0 0.0
        %1421 = vmatpush1.msra.mxu0 0.0
        %1422 = vmatprep.subr.mxu0 0.0
        %1423 = vmatpush1.msra.mxu0 0.0
        %1424 = vmatprep.subr.mxu0 0.0
        %1425 = vmatpush1.msra.mxu0 0.0
        %1426 = vmatprep.subr.mxu0 0.0
        %1427 = vmatpush1.msra.mxu0 0.0
        %1428 = vmatprep.subr.mxu0 0.0
        %1429 = vmatpush1.msra.mxu0 0.0
        %1430 = vmatprep.subr.mxu0 0.0
        %1431 = vmatpush1.msra.mxu0 0.0
        %1432 = vmatprep.subr.mxu0 0.0
        %1433 = vmatpush1.msra.mxu0 0.0
        %1434 = vmatprep.subr.mxu0 0.0
        %1435 = vmatpush1.msra.mxu0 0.0
        %1436 = vmatprep.subr.mxu0 0.0
        %1437 = vmatpush1.msra.mxu0 0.0
        %1438 = vmatprep.subr.mxu0 0.0
        %1439 = vmatpush1.msra.mxu0 0.0
        %1440 = vmatprep.subr.mxu0 0.0
        %1441 = vmatpush1.msra.mxu0 0.0
        %1442 = vmatprep.subr.mxu0 0.0
        %1443 = vmatpush1.msra.mxu0 0.0
        %1444 = vmatprep.subr.mxu0 0.0
        %1445 = vmatpush1.msra.mxu0 0.0
        %1446 = vmatprep.subr.mxu0 0.0
        %1447 = vmatpush1.msra.mxu0 0.0
        %1448 = vmatprep.subr.mxu0 0.0
        %1449 = vmatpush1.msra.mxu0 0.0
        %1450 = vmatprep.subr.mxu0 0.0
        %1451 = vmatpush1.msra.mxu0 0.0
        %1452 = vmatprep.subr.mxu0 0.0
        %1453 = vmatpush1.msra.mxu0 0.0
        %1454 = vmatprep.subr.mxu0 0.0
        %1455 = vmatpush1.msra.mxu0 0.0
        %1456 = vmatprep.mubr.f32.mxu0 0.0
        %1457 = vmatmul.mubr.f32.gmra.mrb[0].mxu0 %v1390
        %v1458 = vpop.f32.mrb[0].mxu0
        %v1459 = vadd.f32 0.0, %v1458
        %v1460 = vpop.f32.mrb[0].mxu0
        %1461 = vdwg.mxu0
        %1462 = vrot.lane.b32.xlu0 %v291, 100
        %v1463 = vpop.permute.xlu0 %1462
        %1464 = vrot.lane.b32.xlu0 %v288, 68
        %v1465 = vpop.permute.xlu0 %1464
        %v1466 = vsel %vm295, %v1463, 0
        %v1468 = vsel %vm295, %v1465, 0
        %1470 = vmatprep.subr.mxu0 0.0
        %1471 = vmatpush1.xpose.msra.mxu0 %v1468
        %1472 = vmatprep.subr.mxu0 0.0
        %1473 = vmatpush1.xpose.msra.mxu0 0.0
        %1474 = vmatprep.subr.mxu0 0.0
        %1475 = vmatpush1.xpose.msra.mxu0 0.0
        %1476 = vmatprep.subr.mxu0 0.0
        %1477 = vmatpush1.xpose.msra.mxu0 0.0
        %1478 = vmatprep.subr.mxu0 0.0
        %1479 = vmatpush1.xpose.msra.mxu0 0.0
        %1480 = vmatprep.subr.mxu0 0.0
        %1481 = vmatpush1.xpose.msra.mxu0 0.0
        %1482 = vmatprep.subr.mxu0 0.0
        %1483 = vmatpush1.xpose.msra.mxu0 0.0
        %1484 = vmatprep.subr.mxu0 0.0
        %1485 = vmatpush1.xpose.msra.mxu0 0.0
        %1486 = vmatprep.subr.mxu0 0.0
        %1487 = vmatpush1.xpose.msra.mxu0 0.0
        %1488 = vmatprep.subr.mxu0 0.0
        %1489 = vmatpush1.xpose.msra.mxu0 0.0
        %1490 = vmatprep.subr.mxu0 0.0
        %1491 = vmatpush1.xpose.msra.mxu0 0.0
        %1492 = vmatprep.subr.mxu0 0.0
        %1493 = vmatpush1.xpose.msra.mxu0 0.0
        %1494 = vmatprep.subr.mxu0 0.0
        %1495 = vmatpush1.xpose.msra.mxu0 0.0
        %1496 = vmatprep.subr.mxu0 0.0
        %1497 = vmatpush1.xpose.msra.mxu0 0.0
        %1498 = vmatprep.subr.mxu0 0.0
        %1499 = vmatpush1.xpose.msra.mxu0 0.0
        %1500 = vmatprep.subr.mxu0 0.0
        %1501 = vmatpush1.xpose.msra.mxu0 0.0
        %1502 = vmatprep.subr.mxu0 0.0
        %1503 = vmatpush1.xpose.msra.mxu0 0.0
        %1504 = vmatprep.subr.mxu0 0.0
        %1505 = vmatpush1.xpose.msra.mxu0 0.0
        %1506 = vmatprep.subr.mxu0 0.0
        %1507 = vmatpush1.xpose.msra.mxu0 0.0
        %1508 = vmatprep.subr.mxu0 0.0
        %1509 = vmatpush1.xpose.msra.mxu0 0.0
        %1510 = vmatprep.subr.mxu0 0.0
        %1511 = vmatpush1.xpose.msra.mxu0 0.0
        %1512 = vmatprep.subr.mxu0 0.0
        %1513 = vmatpush1.xpose.msra.mxu0 0.0
        %1514 = vmatprep.subr.mxu0 0.0
        %1515 = vmatpush1.xpose.msra.mxu0 0.0
        %1516 = vmatprep.subr.mxu0 0.0
        %1517 = vmatpush1.xpose.msra.mxu0 0.0
        %1518 = vmatprep.subr.mxu0 0.0
        %1519 = vmatpush1.xpose.msra.mxu0 0.0
        %1520 = vmatprep.subr.mxu0 0.0
        %1521 = vmatpush1.xpose.msra.mxu0 0.0
        %1522 = vmatprep.subr.mxu0 0.0
        %1523 = vmatpush1.xpose.msra.mxu0 0.0
        %1524 = vmatprep.subr.mxu0 0.0
        %1525 = vmatpush1.xpose.msra.mxu0 0.0
        %1526 = vmatprep.subr.mxu0 0.0
        %1527 = vmatpush1.xpose.msra.mxu0 0.0
        %1528 = vmatprep.subr.mxu0 0.0
        %1529 = vmatpush1.xpose.msra.mxu0 0.0
        %1530 = vmatprep.subr.mxu0 0.0
        %1531 = vmatpush1.xpose.msra.mxu0 0.0
        %1532 = vmatprep.subr.mxu0 0.0
        %1533 = vmatpush1.xpose.msra.mxu0 0.0
        %1534 = vmatprep.mubr.f32.mxu0 0.0
        %1535 = vmatmul.mubr.f32.gmra.mrb[0].mxu0 %v1466
        %v1536 = vpop.f32.mrb[0].mxu0
        %v1537 = vadd.f32 0.0, %v1536
        %v1538 = vpop.f32.mrb[0].mxu0
        %1539 = vdwg.mxu0
        %v1540 = vsel %vm371, %v1537, -inf
        %1541 = vmax.xlane.f32.xlu0 %v1540
        %v1542 = vpop.xlane.xlu0 %1541
        %v1543 = vsub.f32 %v1537, %v1542
        %v1544 = vmul.f32 %v1543, 1.442695
        %v1545 = vpow.pop %v1544
        %v1546 = vsel %vm371, %v1545, 0.0
        %1547 = vadd.xlane.f32.xlu0 %v1546
        %v1548 = vpop.xlane.xlu0 %1547
        %v1549 = vrcp.pop %v1548
        %v1550 = vmul.f32 %v1545, %v1549
        %s1551 = scalar_lea.vmem %s211, 56 [#allocation8]
        %1552 = vst.msk [vmem:[%s1551] sm:$0xff] %vm371, %v1550
        %1553 = vrot.lane.b32.xlu0 %v288, 36
        %v1554 = vpop.permute.xlu0 %1553
        %v1557 = vsel %vm371, %v1550, 0
        %1559 = vmatprep.subr.mxu0 0.0
        %1560 = vmatpush1.msra.mxu0 %v1554
        %1561 = vmatprep.subr.mxu0 0.0
        %1562 = vmatpush1.msra.mxu0 0.0
        %1563 = vmatprep.subr.mxu0 0.0
        %1564 = vmatpush1.msra.mxu0 0.0
        %1565 = vmatprep.subr.mxu0 0.0
        %1566 = vmatpush1.msra.mxu0 0.0
        %1567 = vmatprep.subr.mxu0 0.0
        %1568 = vmatpush1.msra.mxu0 0.0
        %1569 = vmatprep.subr.mxu0 0.0
        %1570 = vmatpush1.msra.mxu0 0.0
        %1571 = vmatprep.subr.mxu0 0.0
        %1572 = vmatpush1.msra.mxu0 0.0
        %1573 = vmatprep.subr.mxu0 0.0
        %1574 = vmatpush1.msra.mxu0 0.0
        %1575 = vmatprep.subr.mxu0 0.0
        %1576 = vmatpush1.msra.mxu0 0.0
        %1577 = vmatprep.subr.mxu0 0.0
        %1578 = vmatpush1.msra.mxu0 0.0
        %1579 = vmatprep.subr.mxu0 0.0
        %1580 = vmatpush1.msra.mxu0 0.0
        %1581 = vmatprep.subr.mxu0 0.0
        %1582 = vmatpush1.msra.mxu0 0.0
        %1583 = vmatprep.subr.mxu0 0.0
        %1584 = vmatpush1.msra.mxu0 0.0
        %1585 = vmatprep.subr.mxu0 0.0
        %1586 = vmatpush1.msra.mxu0 0.0
        %1587 = vmatprep.subr.mxu0 0.0
        %1588 = vmatpush1.msra.mxu0 0.0
        %1589 = vmatprep.subr.mxu0 0.0
        %1590 = vmatpush1.msra.mxu0 0.0
        %1591 = vmatprep.subr.mxu0 0.0
        %1592 = vmatpush1.msra.mxu0 0.0
        %1593 = vmatprep.subr.mxu0 0.0
        %1594 = vmatpush1.msra.mxu0 0.0
        %1595 = vmatprep.subr.mxu0 0.0
        %1596 = vmatpush1.msra.mxu0 0.0
        %1597 = vmatprep.subr.mxu0 0.0
        %1598 = vmatpush1.msra.mxu0 0.0
        %1599 = vmatprep.subr.mxu0 0.0
        %1600 = vmatpush1.msra.mxu0 0.0
        %1601 = vmatprep.subr.mxu0 0.0
        %1602 = vmatpush1.msra.mxu0 0.0
        %1603 = vmatprep.subr.mxu0 0.0
        %1604 = vmatpush1.msra.mxu0 0.0
        %1605 = vmatprep.subr.mxu0 0.0
        %1606 = vmatpush1.msra.mxu0 0.0
        %1607 = vmatprep.subr.mxu0 0.0
        %1608 = vmatpush1.msra.mxu0 0.0
        %1609 = vmatprep.subr.mxu0 0.0
        %1610 = vmatpush1.msra.mxu0 0.0
        %1611 = vmatprep.subr.mxu0 0.0
        %1612 = vmatpush1.msra.mxu0 0.0
        %1613 = vmatprep.subr.mxu0 0.0
        %1614 = vmatpush1.msra.mxu0 0.0
        %1615 = vmatprep.subr.mxu0 0.0
        %1616 = vmatpush1.msra.mxu0 0.0
        %1617 = vmatprep.subr.mxu0 0.0
        %1618 = vmatpush1.msra.mxu0 0.0
        %1619 = vmatprep.subr.mxu0 0.0
        %1620 = vmatpush1.msra.mxu0 0.0
        %1621 = vmatprep.subr.mxu0 0.0
        %1622 = vmatpush1.msra.mxu0 0.0
        %1623 = vmatprep.mubr.f32.mxu0 0.0
        %1624 = vmatmul.mubr.f32.gmra.mrb[0].mxu0 %v1557
        %v1625 = vpop.f32.mrb[0].mxu0
        %v1626 = vadd.f32 0.0, %v1625
        %v1627 = vpop.f32.mrb[0].mxu0
        %1628 = vdwg.mxu0
        %1630 = vrot.lane.b32.xlu0 %v624, 4
        %v1631 = vpop.permute.xlu0 %1630
        %1634 = vrot.lane.b32.xlu0 %v791, 8
        %v1635 = vpop.permute.xlu0 %1634
        %1638 = vrot.lane.b32.xlu0 %v958, 12
        %v1639 = vpop.permute.xlu0 %1638
        %1642 = vrot.lane.b32.xlu0 %v1125, 16
        %v1643 = vpop.permute.xlu0 %1642
        %1646 = vrot.lane.b32.xlu0 %v1292, 20
        %v1647 = vpop.permute.xlu0 %1646
        %1650 = vrot.lane.b32.xlu0 %v1459, 24
        %v1651 = vpop.permute.xlu0 %1650
        %1654 = vrot.lane.b32.xlu0 %v1626, 28
        %v1655 = vpop.permute.xlu0 %1654
        %v1657 = vsel %vm295, %v457, %v1631
        %v1658 = vsel %vm371, %v1657, %v1635
        %vm1659 = vcmask 97280
        %v1660 = vsel %vm1659, %v1658, %v1639
        %vm1661 = vcmask 130048
        %v1662 = vsel %vm1661, %v1660, %v1643
        %vm1663 = vcmask 162816
        %v1664 = vsel %vm1663, %v1662, %v1647
        %vm1665 = vcmask 195584
        %v1666 = vsel %vm1665, %v1664, %v1651
        %vm1667 = vcmask 228352
        %v1668 = vsel %vm1667, %v1666, %v1655
        %1669 = vst.msk [vmem:[%s204] sm:$0xff] %vm217, %v1668
        %s1670 = sand.u32 %s80, 1
        %s1671 = scalar_lea.sflag [#allocation4], %s1670
        %s1672 = sand.u32 %s80, 1
        %s1673 = smul.addr %s1672, 8
        %s1674 = scalar_lea.vmem [#allocation7], %s1673
        %s1675 = sand.u32 %s106, 1
        %s1676 = scalar_lea.sflag [#allocation9], %s1675
        %s1677 = sand.u32 %s106, 1
        %s1678 = smul.addr %s1677, 64
        %s1679 = scalar_lea.vmem [#allocation8], %s1678
        // Predicated region
        $region37: #{tpu_custom_call.1} parent=27 // pred_check
          %p1680 = pneg %p90
        $region38: #{tpu_custom_call.1} parent=27 // pred_check_branch
          %1682 = sbr.rel (%p1680) target = $region40
        $region39: #{tpu_custom_call.1} parent=27 // pred_region
          %s1684 = ssub.s32 128, 128
          %1685 = vsyncadd %s1671, %s1684
          %s1686 = smul.addr %s25, 128
          %s1687 = scalar_lea.hbm %s2, %s1686
          %s1689 = sshll.u32 %s1674, 4
          %s1690 = int_to_ptr.vmem [resolvable:$true] %s1689
          %1692 = dma.vmem_to_hbm [thread:$0]  %s1690, 128, %s1687, %s1671
        $region40: #{tpu_custom_call.1} parent=27 // pred_fallthru
          _
        // Predicated region
        $region41: #{tpu_custom_call.1} parent=27 // pred_check
          %p1693 = pneg %p116
        $region42: #{tpu_custom_call.1} parent=27 // pred_check_branch
          %1695 = sbr.rel (%p1693) target = $region44
        $region43: #{tpu_custom_call.1} parent=27 // pred_region
          %s1697 = ssub.s32 1024, 1024
          %1698 = vsyncadd %s1676, %s1697
          %s1699 = smul.addr %s25, 8
          %s1700 = smul.addr %s1699, 128
          %s1701 = scalar_lea.hbm %s3, %s1700
          %s1702 = sshll.u32 %s1679, 4
          %s1703 = int_to_ptr.vmem [resolvable:$true] %s1702
          %1708 = dma.vmem_to_hbm [thread:$0]  %s1703, 1024, %s1701, %s1676, 128, 128, 8
        $region44: #{tpu_custom_call.1} parent=27 // pred_fallthru
          _
      $region28: #{tpu_custom_call.1} parent=5 // pred_fallthru
        _
      %p1709 = scmp.le.s32.totalorder 2, %s20
      // Predicated region
      $region45: #{tpu_custom_call.1} parent=5 // pred_check
        %p1710 = pneg %p1709
      $region46: #{tpu_custom_call.1} parent=5 // pred_check_branch
        %1712 = sbr.rel (%p1710) target = $region48
      $region47: #{tpu_custom_call.1} parent=5 // pred_region
        %s1713 = ssub.s32 %s20, 2
        // Predicated region
        $region49: #{tpu_custom_call.1} parent=47 // pred_check
          %p1714 = pneg %p96
        $region50: #{tpu_custom_call.1} parent=47 // pred_check_branch
          %1716 = sbr.rel (%p1714) target = $region52
        $region51: #{tpu_custom_call.1} parent=47 // pred_region
          %s1717 = sand.u32 %s81, 1
          %s1718 = scalar_lea.sflag [#allocation4], %s1717
          %s1719 = sand.u32 %s81, 1
          %s1720 = smul.addr %s1719, 8
          %s1721 = scalar_lea.vmem [#allocation7], %s1720
          %1722 = dma.done %s1718, 128
        $region52: #{tpu_custom_call.1} parent=47 // pred_fallthru
          _
        // Predicated region
        $region53: #{tpu_custom_call.1} parent=47 // pred_check
          %p1723 = pneg %p122
        $region54: #{tpu_custom_call.1} parent=47 // pred_check_branch
          %1725 = sbr.rel (%p1723) target = $region56
        $region55: #{tpu_custom_call.1} parent=47 // pred_region
          %s1726 = sand.u32 %s107, 1
          %s1727 = scalar_lea.sflag [#allocation9], %s1726
          %s1728 = sand.u32 %s107, 1
          %s1729 = smul.addr %s1728, 64
          %s1730 = scalar_lea.vmem [#allocation8], %s1729
          %1731 = dma.done %s1727, 1024
        $region56: #{tpu_custom_call.1} parent=47 // pred_fallthru
          _
      $region48: #{tpu_custom_call.1} parent=5 // pred_fallthru
        _
    $region6: #{tpu_custom_call.1} parent=1 // loop_footer
      %s24 = sadd.s32 1, %s20
    $region7: #{tpu_custom_call.1} parent=1 // loop_footer_branch
      %19 = sbr.rel target = $region3
    $region8: #{tpu_custom_call.1} parent=1 // loop_exit
      _
    %1732 = vsyncpa [#allocation3], 1
    %s1733 = scalar_lea.sflag [#allocation3], 1
    %1734 = vsyncpa %s1733, 1
    %1735 = vsyncpa [#allocation6], 1
    %1736 = vsyncpa [#allocation4], 1
    %s1737 = scalar_lea.sflag [#allocation4], 1
    %1738 = vsyncpa %s1737, 1
    %1739 = vsyncpa [#allocation9], 1
    %s1740 = scalar_lea.sflag [#allocation9], 1
    %1741 = vsyncpa %s1740, 1

</llo_original>
